<compile_context>
chip_gen: v6e
topology: v6e:2x2x1
jax: 0.10.0
libtpu: 0.0.40
codegen_flags: <defaults>
</compile_context>

<pallas_src>
import functools

import jax
import jax.numpy as jnp
from jax.experimental import pallas as pl
from jax.experimental.pallas import tpu as pltpu

# ---------------- model hyper-parameters (small, consistent with the module) -------------
B = 2          # batch
T = 8          # seq_len
D = 32         # d_model
N_HEAD = 4
HEAD = D // N_HEAD
D_FF = 4 * D
EPS = 1e-5


def _layernorm(v, g, b):
    mean = jnp.mean(v, axis=-1, keepdims=True)
    var = jnp.mean((v - mean) ** 2, axis=-1, keepdims=True)
    return (v - mean) * jax.lax.rsqrt(var + EPS) * g + b


def decoder_block_kernel(n_head,
                         x_ref, wqkv_ref, wo_ref, w1_ref, w2_ref, lnp_ref,
                         o_ref):
    # x_ref:    (B, T, D)     activations
    # wqkv_ref: (D, 3*D)      packed [Wq | Wk | Wv], each head-major along its D columns
    # wo_ref:   (D, D)        output projection
    # w1_ref:   (D, D_FF)     FFN up-projection
    # w2_ref:   (D_FF, D)     FFN down-projection
    # lnp_ref:  (4, D)        packed [gamma1; beta1; gamma2; beta2]
    x = x_ref[...]                                           # (B, T, D) already f32 [P4]
    bsz, seq, d_model = x.shape
    hs = d_model // n_head

    lnp = lnp_ref[...]
    g1, b1, g2, b2 = lnp[0:1], lnp[1:2], lnp[2:3], lnp[3:4]  # (1, D) each

    # ---- LayerNorm 1 ----
    ln1 = _layernorm(x, g1, b1)                              # (B, T, D)

    # ---- fused dense QKV projection: one (B*T, D) @ (D, 3D) MXU op [P1] ----
    ln1_2d = ln1.reshape(bsz * seq, d_model)                 # (16, 32)
    qkv = jnp.dot(ln1_2d, wqkv_ref[...],
                  preferred_element_type=jnp.float32)        # (16, 96)
    qkv = qkv.reshape(bsz, seq, 3 * d_model)                 # (B, T, 3D)

    # ---- causal mask, built once in-kernel ----
    row = jax.lax.broadcasted_iota(jnp.int32, (seq, seq), 0)
    col = jax.lax.broadcasted_iota(jnp.int32, (seq, seq), 1)
    causal = (row >= col)[None]                              # (1, T, T)

    scale = jnp.float32(d_model) ** -0.5                     # reference scales by C = d_model

    # ---- per-head attention on 8-wide column slices of the dense QKV result ----
    head_outs = []
    for h in range(n_head):
        q_h = qkv[..., h * hs:(h + 1) * hs]                                  # (B, T, hs)
        k_h = qkv[..., d_model + h * hs:d_model + (h + 1) * hs]              # (B, T, hs)
        v_h = qkv[..., 2 * d_model + h * hs:2 * d_model + (h + 1) * hs]      # (B, T, hs)
        s = jnp.einsum('btc,bsc->bts', q_h, k_h,
                       preferred_element_type=jnp.float32) * scale           # (B, T, T)
        s = jnp.where(causal, s, jnp.float32(1e-9))          # value fill, as the reference
        m = jnp.max(s, axis=-1, keepdims=True)
        e = jnp.exp(s - m)
        p = e * pl.reciprocal(jnp.sum(e, axis=-1, keepdims=True),
                              approx=False)                  # exact, keeps 1e-5 check [P5]
        head_outs.append(jnp.einsum('bts,bsc->btc', p, v_h,
                                    preferred_element_type=jnp.float32))     # (B, T, hs)

    # ---- dense output projection: concat(heads) @ Wo as one (B*T,D)@(D,D) matmul [P2] ----
    mha = jnp.concatenate(head_outs, axis=-1)                # (B, T, D)
    attn = jnp.dot(mha.reshape(bsz * seq, d_model), wo_ref[...],
                   preferred_element_type=jnp.float32)       # (16, 32)
    x1 = x + attn.reshape(bsz, seq, d_model)                 # residual 1

    # ---- LayerNorm 2 + feed-forward: dense 2-D matmuls over merged (B*T) axis [P3] ----
    ln2 = _layernorm(x1, g2, b2).reshape(bsz * seq, d_model)                 # (16, 32)
    hid = jnp.maximum(jnp.dot(ln2, w1_ref[...],
                              preferred_element_type=jnp.float32), 0.0)      # (16, 128)
    ff = jnp.dot(hid, w2_ref[...],
                 preferred_element_type=jnp.float32)                         # (16, 32)

    o_ref[...] = (x1 + ff.reshape(bsz, seq, d_model)).astype(o_ref.dtype)    # residual 2


def decoder_block(x, params):
    """x: (B, T, D) float32; params: PyTorch-layout weights (see init_params)."""
    b, t, d = x.shape
    n_head = N_HEAD

    # ---- wrapper-side weight repacking (plain XLA ops; layout plumbing, not compute) ----
    wqkv = jnp.concatenate([params["wq"], params["wk"], params["wv"]],
                           axis=1)                                           # (D, 3D) [P1]
    lnp = jnp.concatenate([params["g1"], params["b1"],
                           params["g2"], params["b2"]], axis=0)              # (4, D)

    kernel = functools.partial(decoder_block_kernel, n_head)
    vmem = pl.BlockSpec(memory_space=pltpu.MemorySpace.VMEM)

    # Single invocation (no grid): the whole 2 KiB problem lives in VMEM; no pipeline,
    # no per-step DMA re-issue, minimal scaffolding [P4].
    return pl.pallas_call(
        kernel,
        out_shape=jax.ShapeDtypeStruct((b, t, d), jnp.float32),
        in_specs=[vmem] * 6,
        out_specs=vmem,
    )(x, wqkv, params["wo"], params["w_ff1"], params["w_ff2"], lnp)


def init_params(key):
    """Deterministic synthetic init (no checkpoint loading); PyTorch-equivalent layout."""
    ks = jax.random.split(key, 6)
    scale = 0.02
    return {
        # packed projection weights: columns [h*HEAD:(h+1)*HEAD] belong to head h
        "wq": scale * jax.random.normal(ks[0], (D, D), jnp.float32),
        "wk": scale * jax.random.normal(ks[1], (D, D), jnp.float32),
        "wv": scale * jax.random.normal(ks[2], (D, D), jnp.float32),
        "wo": scale * jax.random.normal(ks[3], (D, D), jnp.float32),
        "w_ff1": scale * jax.random.normal(ks[4], (D, D_FF), jnp.float32),
        "w_ff2": scale * jax.random.normal(ks[5], (D_FF, D), jnp.float32),
        "g1": jnp.ones((1, D), jnp.float32),
        "b1": jnp.zeros((1, D), jnp.float32),
        "g2": jnp.ones((1, D), jnp.float32),
        "b2": jnp.zeros((1, D), jnp.float32),
    }


def decoder_block_ref(x, p):
    """Pure-JAX reference, mirroring the PyTorch forward exactly (eval mode)."""
    def ln(v, g, b):
        m = jnp.mean(v, axis=-1, keepdims=True)
        var = jnp.mean((v - m) ** 2, axis=-1, keepdims=True)
        return (v - m) * jax.lax.rsqrt(var + EPS) * g + b

    tril = jnp.tril(jnp.ones((x.shape[1], x.shape[1]), jnp.float32))
    h1 = ln(x, p["g1"], p["b1"])
    q = h1 @ p["wq"]; k = h1 @ p["wk"]; v = h1 @ p["wv"]
    outs = []
    for h in range(N_HEAD):
        sl = slice(h * HEAD, (h + 1) * HEAD)
        s = jnp.einsum("btd,bsd->bts", q[..., sl], k[..., sl]) * (D ** -0.5)
        s = jnp.where(tril == 0.0, 1e-9, s)
        a = jax.nn.softmax(s, axis=-1)
        outs.append(jnp.einsum("bts,bsd->btd", a, v[..., sl]))
    mha = jnp.concatenate(outs, axis=-1) @ p["wo"]
    x1 = x + mha
    h2 = ln(x1, p["g2"], p["b2"])
    ff = jnp.maximum(h2 @ p["w_ff1"], 0.0) @ p["w_ff2"]
    return x1 + ff


if __name__ == "__main__":
    key = jax.random.PRNGKey(0)
    kx, kp = jax.random.split(key)
    x = jax.random.normal(kx, (B, T, D), jnp.float32)
    params = init_params(kp)

    out = jax.block_until_ready(decoder_block(x, params))
    ref = decoder_block_ref(x, params)

    assert out.shape == (B, T, D)
    assert jnp.allclose(out, ref, atol=1e-5, rtol=1e-5), "mismatch vs pure-JAX reference"
    print("KERNEL_OK")
</pallas_src>

<mosaic_0001>
module attributes {stable_mosaic.version = 11 : i64} {
  func.func @decoder_block_kernel(%arg0: memref<2x8x32xf32, #tpu.memory_space<vmem>>, %arg1: memref<32x96xf32, #tpu.memory_space<vmem>>, %arg2: memref<32x32xf32, #tpu.memory_space<vmem>>, %arg3: memref<32x128xf32, #tpu.memory_space<vmem>>, %arg4: memref<128x32xf32, #tpu.memory_space<vmem>>, %arg5: memref<4x32xf32, #tpu.memory_space<vmem>>, %arg6: memref<2x8x32xf32, #tpu.memory_space<vmem>>) attributes {dimension_semantics = [], scalar_prefetch = 0 : i64, scratch_operands = 0 : i64, tpu.core_type = #tpu.core_type<tc>} {
    %c0 = arith.constant 0 : index
    %c0_0 = arith.constant 0 : index
    %c0_1 = arith.constant 0 : index
    %0 = vector.load %arg0[%c0, %c0_0, %c0_1] : memref<2x8x32xf32, #tpu.memory_space<vmem>>, vector<2x8x32xf32>
    %c0_2 = arith.constant 0 : index
    %c0_3 = arith.constant 0 : index
    %1 = vector.load %arg5[%c0_2, %c0_3] : memref<4x32xf32, #tpu.memory_space<vmem>>, vector<4x32xf32>
    %2 = vector.extract_strided_slice %1 {offsets = [0, 0], sizes = [1, 32], strides = [1, 1]} : vector<4x32xf32> to vector<1x32xf32>
    %3 = vector.extract_strided_slice %1 {offsets = [1, 0], sizes = [1, 32], strides = [1, 1]} : vector<4x32xf32> to vector<1x32xf32>
    %4 = vector.extract_strided_slice %1 {offsets = [2, 0], sizes = [1, 32], strides = [1, 1]} : vector<4x32xf32> to vector<1x32xf32>
    %5 = vector.extract_strided_slice %1 {offsets = [3, 0], sizes = [1, 32], strides = [1, 1]} : vector<4x32xf32> to vector<1x32xf32>
    %cst = arith.constant dense<0.000000e+00> : vector<2x8xf32>
    %6 = vector.multi_reduction <add>, %0, %cst [2] : vector<2x8x32xf32> to vector<2x8xf32>
    %7 = vector.shape_cast %6 : vector<2x8xf32> to vector<2x8x1xf32>
    %cst_4 = arith.constant 3.200000e+01 : f32
    %8 = vector.broadcast %cst_4 : f32 to vector<2x8x1xf32>
    %9 = arith.divf %7, %8 : vector<2x8x1xf32>
    %10 = vector.broadcast %9 : vector<2x8x1xf32> to vector<2x8x32xf32>
    %11 = arith.subf %0, %10 : vector<2x8x32xf32>
    %12 = arith.mulf %11, %11 : vector<2x8x32xf32>
    %cst_5 = arith.constant dense<0.000000e+00> : vector<2x8xf32>
    %13 = vector.multi_reduction <add>, %12, %cst_5 [2] : vector<2x8x32xf32> to vector<2x8xf32>
    %14 = vector.shape_cast %13 : vector<2x8xf32> to vector<2x8x1xf32>
    %cst_6 = arith.constant 3.200000e+01 : f32
    %15 = vector.broadcast %cst_6 : f32 to vector<2x8x1xf32>
    %16 = arith.divf %14, %15 : vector<2x8x1xf32>
    %17 = vector.broadcast %9 : vector<2x8x1xf32> to vector<2x8x32xf32>
    %18 = arith.subf %0, %17 : vector<2x8x32xf32>
    %cst_7 = arith.constant 9.99999974E-6 : f32
    %19 = vector.broadcast %cst_7 : f32 to vector<2x8x1xf32>
    %20 = arith.addf %16, %19 : vector<2x8x1xf32>
    %21 = math.rsqrt %20 : vector<2x8x1xf32>
    %22 = vector.broadcast %21 : vector<2x8x1xf32> to vector<2x8x32xf32>
    %23 = arith.mulf %18, %22 : vector<2x8x32xf32>
    %24 = vector.shape_cast %2 : vector<1x32xf32> to vector<1x1x32xf32>
    %25 = vector.broadcast %24 : vector<1x1x32xf32> to vector<2x8x32xf32>
    %26 = arith.mulf %23, %25 : vector<2x8x32xf32>
    %27 = vector.shape_cast %3 : vector<1x32xf32> to vector<1x1x32xf32>
    %28 = vector.broadcast %27 : vector<1x1x32xf32> to vector<2x8x32xf32>
    %29 = arith.addf %26, %28 : vector<2x8x32xf32>
    %30 = vector.shape_cast %29 : vector<2x8x32xf32> to vector<16x32xf32>
    %c0_8 = arith.constant 0 : index
    %c0_9 = arith.constant 0 : index
    %31 = vector.load %arg1[%c0_8, %c0_9] : memref<32x96xf32, #tpu.memory_space<vmem>>, vector<32x96xf32>
    %cst_10 = arith.constant dense<0.000000e+00> : vector<16x96xf32>
    %32 = tpu.matmul %30, %31, %cst_10 {dimension_numbers = #tpu.dot_dimension_numbers<[1], [0], [0], [1], [0, 0, 1, 1], [], []>} : vector<16x32xf32>, vector<32x96xf32>, vector<16x96xf32> -> vector<16x96xf32>
    %33 = vector.shape_cast %32 : vector<16x96xf32> to vector<2x8x96xf32>
    %34 = tpu.iota {dimensions = array<i32: 0>} : vector<8x8xi32>
    %35 = tpu.iota {dimensions = array<i32: 1>} : vector<8x8xi32>
    %36 = arith.cmpi sge, %34, %35 : vector<8x8xi32>
    %37 = vector.shape_cast %36 : vector<8x8xi1> to vector<1x8x8xi1>
    %cst_11 = arith.constant 3.200000e+01 : f32
    %cst_12 = arith.constant -5.000000e-01 : f32
    %38 = math.powf %cst_11, %cst_12 : f32
    %39 = vector.extract_strided_slice %33 {offsets = [0, 0, 0], sizes = [2, 8, 8], strides = [1, 1, 1]} : vector<2x8x96xf32> to vector<2x8x8xf32>
    %40 = vector.extract_strided_slice %33 {offsets = [0, 0, 32], sizes = [2, 8, 8], strides = [1, 1, 1]} : vector<2x8x96xf32> to vector<2x8x8xf32>
    %41 = vector.extract_strided_slice %33 {offsets = [0, 0, 64], sizes = [2, 8, 8], strides = [1, 1, 1]} : vector<2x8x96xf32> to vector<2x8x8xf32>
    "tpu.trace_start"() <{level = 10 : i32, message = "btc,bsc->bts"}> : () -> ()
    %cst_13 = arith.constant dense<0.000000e+00> : vector<2x8x8xf32>
    %42 = tpu.matmul %39, %40, %cst_13 {dimension_numbers = #tpu.dot_dimension_numbers<[2], [2], [1], [1], [0, 0, 0, 1, 1, 1], [0], [0]>} : vector<2x8x8xf32>, vector<2x8x8xf32>, vector<2x8x8xf32> -> vector<2x8x8xf32>
    "tpu.trace_stop"() : () -> ()
    %43 = vector.broadcast %38 : f32 to vector<2x8x8xf32>
    %44 = arith.mulf %42, %43 : vector<2x8x8xf32>
    %cst_14 = arith.constant 9.99999971E-10 : f32
    %45 = vector.shape_cast %37 : vector<1x8x8xi1> to vector<1x8x8xi1>
    %46 = vector.broadcast %45 : vector<1x8x8xi1> to vector<2x8x8xi1>
    %47 = vector.broadcast %cst_14 : f32 to vector<2x8x8xf32>
    %48 = arith.select %46, %44, %47 : vector<2x8x8xi1>, vector<2x8x8xf32>
    %cst_15 = arith.constant dense<0xFF800000> : vector<2x8xf32>
    %49 = vector.multi_reduction <maximumf>, %48, %cst_15 [2] : vector<2x8x8xf32> to vector<2x8xf32>
    %50 = vector.shape_cast %49 : vector<2x8xf32> to vector<2x8x1xf32>
    %51 = vector.broadcast %50 : vector<2x8x1xf32> to vector<2x8x8xf32>
    %52 = arith.subf %48, %51 : vector<2x8x8xf32>
    %53 = math.exp %52 : vector<2x8x8xf32>
    %cst_16 = arith.constant dense<0.000000e+00> : vector<2x8xf32>
    %54 = vector.multi_reduction <add>, %53, %cst_16 [2] : vector<2x8x8xf32> to vector<2x8xf32>
    %55 = vector.shape_cast %54 : vector<2x8xf32> to vector<2x8x1xf32>
    %56 = tpu.reciprocal %55 : vector<2x8x1xf32> -> vector<2x8x1xf32>
    %57 = vector.broadcast %56 : vector<2x8x1xf32> to vector<2x8x8xf32>
    %58 = arith.mulf %53, %57 : vector<2x8x8xf32>
    "tpu.trace_start"() <{level = 10 : i32, message = "bts,bsc->btc"}> : () -> ()
    %cst_17 = arith.constant dense<0.000000e+00> : vector<2x8x8xf32>
    %59 = tpu.matmul %58, %41, %cst_17 {dimension_numbers = #tpu.dot_dimension_numbers<[2], [1], [1], [2], [0, 0, 0, 1, 1, 2], [0], [0]>} : vector<2x8x8xf32>, vector<2x8x8xf32>, vector<2x8x8xf32> -> vector<2x8x8xf32>
    "tpu.trace_stop"() : () -> ()
    %60 = vector.extract_strided_slice %33 {offsets = [0, 0, 8], sizes = [2, 8, 8], strides = [1, 1, 1]} : vector<2x8x96xf32> to vector<2x8x8xf32>
    %61 = vector.extract_strided_slice %33 {offsets = [0, 0, 40], sizes = [2, 8, 8], strides = [1, 1, 1]} : vector<2x8x96xf32> to vector<2x8x8xf32>
    %62 = vector.extract_strided_slice %33 {offsets = [0, 0, 72], sizes = [2, 8, 8], strides = [1, 1, 1]} : vector<2x8x96xf32> to vector<2x8x8xf32>
    "tpu.trace_start"() <{level = 10 : i32, message = "btc,bsc->bts"}> : () -> ()
    %cst_18 = arith.constant dense<0.000000e+00> : vector<2x8x8xf32>
    %63 = tpu.matmul %60, %61, %cst_18 {dimension_numbers = #tpu.dot_dimension_numbers<[2], [2], [1], [1], [0, 0, 0, 1, 1, 1], [0], [0]>} : vector<2x8x8xf32>, vector<2x8x8xf32>, vector<2x8x8xf32> -> vector<2x8x8xf32>
    "tpu.trace_stop"() : () -> ()
    %64 = vector.broadcast %38 : f32 to vector<2x8x8xf32>
    %65 = arith.mulf %63, %64 : vector<2x8x8xf32>
    %cst_19 = arith.constant 9.99999971E-10 : f32
    %66 = vector.shape_cast %37 : vector<1x8x8xi1> to vector<1x8x8xi1>
    %67 = vector.broadcast %66 : vector<1x8x8xi1> to vector<2x8x8xi1>
    %68 = vector.broadcast %cst_19 : f32 to vector<2x8x8xf32>
    %69 = arith.select %67, %65, %68 : vector<2x8x8xi1>, vector<2x8x8xf32>
    %cst_20 = arith.constant dense<0xFF800000> : vector<2x8xf32>
    %70 = vector.multi_reduction <maximumf>, %69, %cst_20 [2] : vector<2x8x8xf32> to vector<2x8xf32>
    %71 = vector.shape_cast %70 : vector<2x8xf32> to vector<2x8x1xf32>
    %72 = vector.broadcast %71 : vector<2x8x1xf32> to vector<2x8x8xf32>
    %73 = arith.subf %69, %72 : vector<2x8x8xf32>
    %74 = math.exp %73 : vector<2x8x8xf32>
    %cst_21 = arith.constant dense<0.000000e+00> : vector<2x8xf32>
    %75 = vector.multi_reduction <add>, %74, %cst_21 [2] : vector<2x8x8xf32> to vector<2x8xf32>
    %76 = vector.shape_cast %75 : vector<2x8xf32> to vector<2x8x1xf32>
    %77 = tpu.reciprocal %76 : vector<2x8x1xf32> -> vector<2x8x1xf32>
    %78 = vector.broadcast %77 : vector<2x8x1xf32> to vector<2x8x8xf32>
    %79 = arith.mulf %74, %78 : vector<2x8x8xf32>
    "tpu.trace_start"() <{level = 10 : i32, message = "bts,bsc->btc"}> : () -> ()
    %cst_22 = arith.constant dense<0.000000e+00> : vector<2x8x8xf32>
    %80 = tpu.matmul %79, %62, %cst_22 {dimension_numbers = #tpu.dot_dimension_numbers<[2], [1], [1], [2], [0, 0, 0, 1, 1, 2], [0], [0]>} : vector<2x8x8xf32>, vector<2x8x8xf32>, vector<2x8x8xf32> -> vector<2x8x8xf32>
    "tpu.trace_stop"() : () -> ()
    %81 = vector.extract_strided_slice %33 {offsets = [0, 0, 16], sizes = [2, 8, 8], strides = [1, 1, 1]} : vector<2x8x96xf32> to vector<2x8x8xf32>
    %82 = vector.extract_strided_slice %33 {offsets = [0, 0, 48], sizes = [2, 8, 8], strides = [1, 1, 1]} : vector<2x8x96xf32> to vector<2x8x8xf32>
    %83 = vector.extract_strided_slice %33 {offsets = [0, 0, 80], sizes = [2, 8, 8], strides = [1, 1, 1]} : vector<2x8x96xf32> to vector<2x8x8xf32>
    "tpu.trace_start"() <{level = 10 : i32, message = "btc,bsc->bts"}> : () -> ()
    %cst_23 = arith.constant dense<0.000000e+00> : vector<2x8x8xf32>
    %84 = tpu.matmul %81, %82, %cst_23 {dimension_numbers = #tpu.dot_dimension_numbers<[2], [2], [1], [1], [0, 0, 0, 1, 1, 1], [0], [0]>} : vector<2x8x8xf32>, vector<2x8x8xf32>, vector<2x8x8xf32> -> vector<2x8x8xf32>
    "tpu.trace_stop"() : () -> ()
    %85 = vector.broadcast %38 : f32 to vector<2x8x8xf32>
    %86 = arith.mulf %84, %85 : vector<2x8x8xf32>
    %cst_24 = arith.constant 9.99999971E-10 : f32
    %87 = vector.shape_cast %37 : vector<1x8x8xi1> to vector<1x8x8xi1>
    %88 = vector.broadcast %87 : vector<1x8x8xi1> to vector<2x8x8xi1>
    %89 = vector.broadcast %cst_24 : f32 to vector<2x8x8xf32>
    %90 = arith.select %88, %86, %89 : vector<2x8x8xi1>, vector<2x8x8xf32>
    %cst_25 = arith.constant dense<0xFF800000> : vector<2x8xf32>
    %91 = vector.multi_reduction <maximumf>, %90, %cst_25 [2] : vector<2x8x8xf32> to vector<2x8xf32>
    %92 = vector.shape_cast %91 : vector<2x8xf32> to vector<2x8x1xf32>
    %93 = vector.broadcast %92 : vector<2x8x1xf32> to vector<2x8x8xf32>
    %94 = arith.subf %90, %93 : vector<2x8x8xf32>
    %95 = math.exp %94 : vector<2x8x8xf32>
    %cst_26 = arith.constant dense<0.000000e+00> : vector<2x8xf32>
    %96 = vector.multi_reduction <add>, %95, %cst_26 [2] : vector<2x8x8xf32> to vector<2x8xf32>
    %97 = vector.shape_cast %96 : vector<2x8xf32> to vector<2x8x1xf32>
    %98 = tpu.reciprocal %97 : vector<2x8x1xf32> -> vector<2x8x1xf32>
    %99 = vector.broadcast %98 : vector<2x8x1xf32> to vector<2x8x8xf32>
    %100 = arith.mulf %95, %99 : vector<2x8x8xf32>
    "tpu.trace_start"() <{level = 10 : i32, message = "bts,bsc->btc"}> : () -> ()
    %cst_27 = arith.constant dense<0.000000e+00> : vector<2x8x8xf32>
    %101 = tpu.matmul %100, %83, %cst_27 {dimension_numbers = #tpu.dot_dimension_numbers<[2], [1], [1], [2], [0, 0, 0, 1, 1, 2], [0], [0]>} : vector<2x8x8xf32>, vector<2x8x8xf32>, vector<2x8x8xf32> -> vector<2x8x8xf32>
    "tpu.trace_stop"() : () -> ()
    %102 = vector.extract_strided_slice %33 {offsets = [0, 0, 24], sizes = [2, 8, 8], strides = [1, 1, 1]} : vector<2x8x96xf32> to vector<2x8x8xf32>
    %103 = vector.extract_strided_slice %33 {offsets = [0, 0, 56], sizes = [2, 8, 8], strides = [1, 1, 1]} : vector<2x8x96xf32> to vector<2x8x8xf32>
    %104 = vector.extract_strided_slice %33 {offsets = [0, 0, 88], sizes = [2, 8, 8], strides = [1, 1, 1]} : vector<2x8x96xf32> to vector<2x8x8xf32>
    "tpu.trace_start"() <{level = 10 : i32, message = "btc,bsc->bts"}> : () -> ()
    %cst_28 = arith.constant dense<0.000000e+00> : vector<2x8x8xf32>
    %105 = tpu.matmul %102, %103, %cst_28 {dimension_numbers = #tpu.dot_dimension_numbers<[2], [2], [1], [1], [0, 0, 0, 1, 1, 1], [0], [0]>} : vector<2x8x8xf32>, vector<2x8x8xf32>, vector<2x8x8xf32> -> vector<2x8x8xf32>
    "tpu.trace_stop"() : () -> ()
    %106 = vector.broadcast %38 : f32 to vector<2x8x8xf32>
    %107 = arith.mulf %105, %106 : vector<2x8x8xf32>
    %cst_29 = arith.constant 9.99999971E-10 : f32
    %108 = vector.shape_cast %37 : vector<1x8x8xi1> to vector<1x8x8xi1>
    %109 = vector.broadcast %108 : vector<1x8x8xi1> to vector<2x8x8xi1>
    %110 = vector.broadcast %cst_29 : f32 to vector<2x8x8xf32>
    %111 = arith.select %109, %107, %110 : vector<2x8x8xi1>, vector<2x8x8xf32>
    %cst_30 = arith.constant dense<0xFF800000> : vector<2x8xf32>
    %112 = vector.multi_reduction <maximumf>, %111, %cst_30 [2] : vector<2x8x8xf32> to vector<2x8xf32>
    %113 = vector.shape_cast %112 : vector<2x8xf32> to vector<2x8x1xf32>
    %114 = vector.broadcast %113 : vector<2x8x1xf32> to vector<2x8x8xf32>
    %115 = arith.subf %111, %114 : vector<2x8x8xf32>
    %116 = math.exp %115 : vector<2x8x8xf32>
    %cst_31 = arith.constant dense<0.000000e+00> : vector<2x8xf32>
    %117 = vector.multi_reduction <add>, %116, %cst_31 [2] : vector<2x8x8xf32> to vector<2x8xf32>
    %118 = vector.shape_cast %117 : vector<2x8xf32> to vector<2x8x1xf32>
    %119 = tpu.reciprocal %118 : vector<2x8x1xf32> -> vector<2x8x1xf32>
    %120 = vector.broadcast %119 : vector<2x8x1xf32> to vector<2x8x8xf32>
    %121 = arith.mulf %116, %120 : vector<2x8x8xf32>
    "tpu.trace_start"() <{level = 10 : i32, message = "bts,bsc->btc"}> : () -> ()
    %cst_32 = arith.constant dense<0.000000e+00> : vector<2x8x8xf32>
    %122 = tpu.matmul %121, %104, %cst_32 {dimension_numbers = #tpu.dot_dimension_numbers<[2], [1], [1], [2], [0, 0, 0, 1, 1, 2], [0], [0]>} : vector<2x8x8xf32>, vector<2x8x8xf32>, vector<2x8x8xf32> -> vector<2x8x8xf32>
    "tpu.trace_stop"() : () -> ()
    %123 = tpu.concatenate %59, %80, %101, %122 in 2 : vector<2x8x8xf32>, vector<2x8x8xf32>, vector<2x8x8xf32>, vector<2x8x8xf32> -> vector<2x8x32xf32>
    %124 = vector.shape_cast %123 : vector<2x8x32xf32> to vector<16x32xf32>
    %c0_33 = arith.constant 0 : index
    %c0_34 = arith.constant 0 : index
    %125 = vector.load %arg2[%c0_33, %c0_34] : memref<32x32xf32, #tpu.memory_space<vmem>>, vector<32x32xf32>
    %cst_35 = arith.constant dense<0.000000e+00> : vector<16x32xf32>
    %126 = tpu.matmul %124, %125, %cst_35 {dimension_numbers = #tpu.dot_dimension_numbers<[1], [0], [0], [1], [0, 0, 1, 1], [], []>} : vector<16x32xf32>, vector<32x32xf32>, vector<16x32xf32> -> vector<16x32xf32>
    %127 = vector.shape_cast %126 : vector<16x32xf32> to vector<2x8x32xf32>
    %128 = arith.addf %0, %127 : vector<2x8x32xf32>
    %cst_36 = arith.constant dense<0.000000e+00> : vector<2x8xf32>
    %129 = vector.multi_reduction <add>, %128, %cst_36 [2] : vector<2x8x32xf32> to vector<2x8xf32>
    %130 = vector.shape_cast %129 : vector<2x8xf32> to vector<2x8x1xf32>
    %cst_37 = arith.constant 3.200000e+01 : f32
    %131 = vector.broadcast %cst_37 : f32 to vector<2x8x1xf32>
    %132 = arith.divf %130, %131 : vector<2x8x1xf32>
    %133 = vector.broadcast %132 : vector<2x8x1xf32> to vector<2x8x32xf32>
    %134 = arith.subf %128, %133 : vector<2x8x32xf32>
    %135 = arith.mulf %134, %134 : vector<2x8x32xf32>
    %cst_38 = arith.constant dense<0.000000e+00> : vector<2x8xf32>
    %136 = vector.multi_reduction <add>, %135, %cst_38 [2] : vector<2x8x32xf32> to vector<2x8xf32>
    %137 = vector.shape_cast %136 : vector<2x8xf32> to vector<2x8x1xf32>
    %cst_39 = arith.constant 3.200000e+01 : f32
    %138 = vector.broadcast %cst_39 : f32 to vector<2x8x1xf32>
    %139 = arith.divf %137, %138 : vector<2x8x1xf32>
    %140 = vector.broadcast %132 : vector<2x8x1xf32> to vector<2x8x32xf32>
    %141 = arith.subf %128, %140 : vector<2x8x32xf32>
    %cst_40 = arith.constant 9.99999974E-6 : f32
    %142 = vector.broadcast %cst_40 : f32 to vector<2x8x1xf32>
    %143 = arith.addf %139, %142 : vector<2x8x1xf32>
    %144 = math.rsqrt %143 : vector<2x8x1xf32>
    %145 = vector.broadcast %144 : vector<2x8x1xf32> to vector<2x8x32xf32>
    %146 = arith.mulf %141, %145 : vector<2x8x32xf32>
    %147 = vector.shape_cast %4 : vector<1x32xf32> to vector<1x1x32xf32>
    %148 = vector.broadcast %147 : vector<1x1x32xf32> to vector<2x8x32xf32>
    %149 = arith.mulf %146, %148 : vector<2x8x32xf32>
    %150 = vector.shape_cast %5 : vector<1x32xf32> to vector<1x1x32xf32>
    %151 = vector.broadcast %150 : vector<1x1x32xf32> to vector<2x8x32xf32>
    %152 = arith.addf %149, %151 : vector<2x8x32xf32>
    %153 = vector.shape_cast %152 : vector<2x8x32xf32> to vector<16x32xf32>
    %c0_41 = arith.constant 0 : index
    %c0_42 = arith.constant 0 : index
    %154 = vector.load %arg3[%c0_41, %c0_42] : memref<32x128xf32, #tpu.memory_space<vmem>>, vector<32x128xf32>
    %cst_43 = arith.constant dense<0.000000e+00> : vector<16x128xf32>
    %155 = tpu.matmul %153, %154, %cst_43 {dimension_numbers = #tpu.dot_dimension_numbers<[1], [0], [0], [1], [0, 0, 1, 1], [], []>} : vector<16x32xf32>, vector<32x128xf32>, vector<16x128xf32> -> vector<16x128xf32>
    %cst_44 = arith.constant 0.000000e+00 : f32
    %156 = vector.broadcast %cst_44 : f32 to vector<16x128xf32>
    %157 = arith.maximumf %155, %156 : vector<16x128xf32>
    %c0_45 = arith.constant 0 : index
    %c0_46 = arith.constant 0 : index
    %158 = vector.load %arg4[%c0_45, %c0_46] : memref<128x32xf32, #tpu.memory_space<vmem>>, vector<128x32xf32>
    %cst_47 = arith.constant dense<0.000000e+00> : vector<16x32xf32>
    %159 = tpu.matmul %157, %158, %cst_47 {dimension_numbers = #tpu.dot_dimension_numbers<[1], [0], [0], [1], [0, 0, 1, 1], [], []>} : vector<16x128xf32>, vector<128x32xf32>, vector<16x32xf32> -> vector<16x32xf32>
    %160 = vector.shape_cast %159 : vector<16x32xf32> to vector<2x8x32xf32>
    %161 = arith.addf %128, %160 : vector<2x8x32xf32>
    %c0_48 = arith.constant 0 : index
    %c0_49 = arith.constant 0 : index
    %c0_50 = arith.constant 0 : index
    %162 = vector.load %arg6[%c0_48, %c0_49, %c0_50] : memref<2x8x32xf32, #tpu.memory_space<vmem>>, vector<2x8x32xf32>
    tpu.vector_store %arg6[%c0_48, %c0_49, %c0_50], %161 {strides = array<i32>} : memref<2x8x32xf32, #tpu.memory_space<vmem>>, vector<2x8x32xf32>,
    return
  }
}

</mosaic_0001>

<llo_original>
// kernel: tpu_custom_call.1
$region0: #{tpu_custom_call.1}
  #allocation0 [shape = 'u32[]', space=smem, size = 0x4, offset = 0x4, fixed_abs, tag = 'smem constant byte address 0x4 - core index']
  #allocation1 [shape = 'u32[144,128]{1,0:T(1,128)}', space=vmem, size = 0x12000, scoped, tag = 'internal scratch']
  %s0 = inlined_call_operand.vmem [shape: f32[2,8,32], index: 0, kind: input, shape index: {}]
  %s1 = inlined_call_operand.vmem [shape: f32[32,96], index: 1, kind: input, shape index: {}]
  %s2 = inlined_call_operand.vmem [shape: f32[32,32], index: 2, kind: input, shape index: {}]
  %s3 = inlined_call_operand.vmem [shape: f32[32,128], index: 3, kind: input, shape index: {}]
  %s4 = inlined_call_operand.vmem [shape: f32[128,32], index: 4, kind: input, shape index: {}]
  %s5 = inlined_call_operand.vmem [shape: f32[4,32], index: 5, kind: input, shape index: {}]
  %s6 = inlined_call_operand.hbm [shape: f32[2,8,32], index: 6, kind: output, shape index: {}]
  %s7 = sld [smem:[#allocation0]]
  $region34: #{tpu_custom_call.1} parent=0
    _
  %s9 = ssub.s32 1, %s7
  %s10 = scalar_select 0, %s9, %s7
  $region1: #{tpu_custom_call.1} parent=0
    #allocation2 [shape = 'u8[8192]{0}', space=vmem, size = 0x2000, scoped, tag = 'output window, operand 0, single buffered']
    #allocation3 [shape = 's32[1]{0}', space=sflag, size = 0x4, scoped, tag = 'scoped memory for tpu_custom_call.1']
    %11 = vsyncpa [#allocation3], 0
    // Predicated region
    $region2: #{tpu_custom_call.1} parent=1 // pred_check
      _
    $region3: #{tpu_custom_call.1} parent=1 // pred_check_branch
      %13 = sbr.rel (0) target = $region5
    $region4: #{tpu_custom_call.1} parent=1 // pred_region
      _
    $region5: #{tpu_custom_call.1} parent=1 // pred_fallthru
      _
    // Predicated region
    $region6: #{tpu_custom_call.1} parent=1 // pred_check
      _
    $region7: #{tpu_custom_call.1} parent=1 // pred_check_branch
      %15 = sbr.rel (0) target = $region9
    $region8: #{tpu_custom_call.1} parent=1 // pred_region
      _
    $region9: #{tpu_custom_call.1} parent=1 // pred_fallthru
      _
    // Predicated region
    $region10: #{tpu_custom_call.1} parent=1 // pred_check
      _
    $region11: #{tpu_custom_call.1} parent=1 // pred_check_branch
      %17 = sbr.rel (0) target = $region13
    $region12: #{tpu_custom_call.1} parent=1 // pred_region
      _
    $region13: #{tpu_custom_call.1} parent=1 // pred_fallthru
      _
    // Predicated region
    $region14: #{tpu_custom_call.1} parent=1 // pred_check
      _
    $region15: #{tpu_custom_call.1} parent=1 // pred_check_branch
      %19 = sbr.rel (0) target = $region17
    $region16: #{tpu_custom_call.1} parent=1 // pred_region
      _
    $region17: #{tpu_custom_call.1} parent=1 // pred_fallthru
      _
    // Predicated region
    $region18: #{tpu_custom_call.1} parent=1 // pred_check
      _
    $region19: #{tpu_custom_call.1} parent=1 // pred_check_branch
      %21 = sbr.rel (0) target = $region21
    $region20: #{tpu_custom_call.1} parent=1 // pred_region
      _
    $region21: #{tpu_custom_call.1} parent=1 // pred_fallthru
      _
    // Predicated region
    $region22: #{tpu_custom_call.1} parent=1 // pred_check
      _
    $region23: #{tpu_custom_call.1} parent=1 // pred_check_branch
      %23 = sbr.rel (0) target = $region25
    $region24: #{tpu_custom_call.1} parent=1 // pred_region
      _
    $region25: #{tpu_custom_call.1} parent=1 // pred_fallthru
      _
    %v24 = vld [vmem:[%s0] sm:$0xff]
    %v25 = vld [vmem:[%s0 + $0x8] sm:$0xff]
    %v26 = vld [vmem:[%s5] sm:$0xf]
    %vm27 = vcmask 261120
    %v28 = vsel %vm27, %v24, 0.0
    %29 = vadd.xlane.f32.xlu0 %v28
    %v30 = vpop.xlane.xlu0 %29
    %v31 = vsel %vm27, %v25, 0.0
    %32 = vadd.xlane.f32.xlu0 %v31
    %v33 = vpop.xlane.xlu0 %32
    %v34 = vrcp.pop 32.0
    %v35 = vmul.f32 %v30, %v34
    %v36 = vmul.f32 %v33, %v34
    %v37 = vsub.f32 %v24, %v35
    %v38 = vsub.f32 %v25, %v36
    %v39 = vmul.f32 %v37, %v37
    %v40 = vmul.f32 %v38, %v38
    %v41 = vsel %vm27, %v39, 0.0
    %42 = vadd.xlane.f32.xlu0 %v41
    %v43 = vpop.xlane.xlu0 %42
    %v44 = vsel %vm27, %v40, 0.0
    %45 = vadd.xlane.f32.xlu0 %v44
    %v46 = vpop.xlane.xlu0 %45
    %v47 = vmul.f32 %v43, %v34
    %v48 = vmul.f32 %v46, %v34
    %v49 = vadd.f32 %v47, 1e-05
    %v50 = vadd.f32 %v48, 1e-05
    %v51 = vrsqrt.pop %v49
    %v52 = vrsqrt.pop %v50
    %v53 = vmul.f32 %v37, %v51
    %v54 = vmul.f32 %v38, %v52
    %v55 = vlaneseq
    %v56 = vshrl.u32 %v55, 7
    %v57 = vsub.s32 0, %v56
    %v58 = vrot.slane %v26, %v57
    %v59 = vmul.f32 %v53, %v58
    %v60 = vmul.f32 %v54, %v58
    %v61 = vlaneseq
    %v62 = vshrl.u32 %v61, 7
    %v63 = vsub.s32 1, %v62
    %v64 = vrot.slane %v26, %v63
    %v65 = vadd.f32 %v59, %v64
    %v66 = vadd.f32 %v60, %v64
    %v67 = vld [vmem:[%s1] sm:$0xff]
    %v68 = vld [vmem:[%s1 + $0x8] sm:$0xff]
    %v69 = vld [vmem:[%s1 + $0x10] sm:$0xff]
    %v70 = vld [vmem:[%s1 + $0x18] sm:$0xff]
    %v72 = vsel %vm27, %v65, 0
    %v75 = vsel %vm27, %v66, 0
    %77 = vmatprep.subr.mxu0 0.0
    %78 = vmatpush1.msra.mxu0 0.0
    %79 = vmatprep.subr.mxu0 0.0
    %80 = vmatpush1.msra.mxu0 0.0
    %81 = vmatprep.subr.mxu0 0.0
    %82 = vmatpush1.msra.mxu0 0.0
    %83 = vmatprep.subr.mxu0 0.0
    %84 = vmatpush1.msra.mxu0 0.0
    %85 = vmatprep.subr.mxu0 0.0
    %86 = vmatpush1.msra.mxu0 0.0
    %87 = vmatprep.subr.mxu0 0.0
    %88 = vmatpush1.msra.mxu0 0.0
    %89 = vmatprep.subr.mxu0 0.0
    %90 = vmatpush1.msra.mxu0 0.0
    %91 = vmatprep.subr.mxu0 0.0
    %92 = vmatpush1.msra.mxu0 0.0
    %93 = vmatprep.subr.mxu0 0.0
    %94 = vmatpush1.msra.mxu0 0.0
    %95 = vmatprep.subr.mxu0 0.0
    %96 = vmatpush1.msra.mxu0 0.0
    %97 = vmatprep.subr.mxu0 0.0
    %98 = vmatpush1.msra.mxu0 0.0
    %99 = vmatprep.subr.mxu0 0.0
    %100 = vmatpush1.msra.mxu0 0.0
    %101 = vmatprep.subr.mxu0 0.0
    %102 = vmatpush1.msra.mxu0 %v70
    %103 = vmatprep.subr.mxu0 0.0
    %104 = vmatpush1.msra.mxu0 %v69
    %105 = vmatprep.subr.mxu0 0.0
    %106 = vmatpush1.msra.mxu0 %v68
    %107 = vmatprep.subr.mxu0 0.0
    %108 = vmatpush1.msra.mxu0 %v67
    %109 = vmatprep.subr.mxu0 0.0
    %110 = vmatpush2.msra.mxu0 0.0
    %111 = vmatprep.subr.mxu0 0.0
    %112 = vmatpush2.msra.mxu0 0.0
    %113 = vmatprep.subr.mxu0 0.0
    %114 = vmatpush2.msra.mxu0 0.0
    %115 = vmatprep.subr.mxu0 0.0
    %116 = vmatpush2.msra.mxu0 0.0
    %117 = vmatprep.subr.mxu0 0.0
    %118 = vmatpush2.msra.mxu0 0.0
    %119 = vmatprep.subr.mxu0 0.0
    %120 = vmatpush2.msra.mxu0 0.0
    %121 = vmatprep.subr.mxu0 0.0
    %122 = vmatpush2.msra.mxu0 0.0
    %123 = vmatprep.subr.mxu0 0.0
    %124 = vmatpush2.msra.mxu0 0.0
    %125 = vmatprep.subr.mxu0 0.0
    %126 = vmatpush2.msra.mxu0 0.0
    %127 = vmatprep.subr.mxu0 0.0
    %128 = vmatpush2.msra.mxu0 0.0
    %129 = vmatprep.subr.mxu0 0.0
    %130 = vmatpush2.msra.mxu0 0.0
    %131 = vmatprep.subr.mxu0 0.0
    %132 = vmatpush2.msra.mxu0 0.0
    %133 = vmatprep.subr.mxu0 0.0
    %134 = vmatpush2.msra.mxu0 0.0
    %135 = vmatprep.subr.mxu0 0.0
    %136 = vmatpush2.msra.mxu0 0.0
    %137 = vmatprep.subr.mxu0 0.0
    %138 = vmatpush2.msra.mxu0 0.0
    %139 = vmatprep.subr.mxu0 0.0
    %140 = vmatpush2.msra.mxu0 0.0
    %141 = vmatprep.mubr.f32.mxu0 0.0
    %142 = vmatmul.mubr.f32.gmra.mxu0 %v72
    %v143 = vpop.f32.mrf.mxu0
    %v144 = vadd.f32 0.0, %v143
    %v145 = vpop.f32.mrf.mxu0
    %146 = vmatprep.mubr.f32.mxu0 0.0
    %147 = vmatmul.mubr.f32.gmra.mxu0 %v75
    %v148 = vpop.f32.mrf.mxu0
    %v149 = vadd.f32 0.0, %v148
    %v150 = vpop.f32.mrf.mxu0
    %151 = vdwg.mxu0
    %v152 = vlaneseq
    %v153 = vshrl.u32 %v152, 7
    %v154 = vlaneseq
    %v155 = vand.u32 %v154, 127
    %vm156 = vcmp.ge.s32.totalorder %v153, %v155
    %158 = vrot.lane.b32.xlu0 %v144, 96
    %v159 = vpop.permute.xlu0 %158
    %vm160 = vcmask 64512
    %v161 = vsel %vm160, %v144, 0
    %v163 = vsel %vm160, %v159, 0
    %165 = vmatprep.subr.mxu0 0.0
    %166 = vmatpush1.xpose.msra.mxu0 0.0
    %167 = vmatprep.subr.mxu0 0.0
    %168 = vmatpush1.xpose.msra.mxu0 0.0
    %169 = vmatprep.subr.mxu0 0.0
    %170 = vmatpush1.xpose.msra.mxu0 0.0
    %171 = vmatprep.subr.mxu0 0.0
    %172 = vmatpush1.xpose.msra.mxu0 0.0
    %173 = vmatprep.subr.mxu0 0.0
    %174 = vmatpush1.xpose.msra.mxu0 0.0
    %175 = vmatprep.subr.mxu0 0.0
    %176 = vmatpush1.xpose.msra.mxu0 0.0
    %177 = vmatprep.subr.mxu0 0.0
    %178 = vmatpush1.xpose.msra.mxu0 0.0
    %179 = vmatprep.subr.mxu0 0.0
    %180 = vmatpush1.xpose.msra.mxu0 0.0
    %181 = vmatprep.subr.mxu0 0.0
    %182 = vmatpush1.xpose.msra.mxu0 0.0
    %183 = vmatprep.subr.mxu0 0.0
    %184 = vmatpush1.xpose.msra.mxu0 0.0
    %185 = vmatprep.subr.mxu0 0.0
    %186 = vmatpush1.xpose.msra.mxu0 0.0
    %187 = vmatprep.subr.mxu0 0.0
    %188 = vmatpush1.xpose.msra.mxu0 0.0
    %189 = vmatprep.subr.mxu0 0.0
    %190 = vmatpush1.xpose.msra.mxu0 0.0
    %191 = vmatprep.subr.mxu0 0.0
    %192 = vmatpush1.xpose.msra.mxu0 0.0
    %193 = vmatprep.subr.mxu0 0.0
    %194 = vmatpush1.xpose.msra.mxu0 0.0
    %195 = vmatprep.subr.mxu0 0.0
    %196 = vmatpush1.xpose.msra.mxu0 %v163
    %197 = vmatprep.subr.mxu0 0.0
    %198 = vmatpush2.xpose.msra.mxu0 0.0
    %199 = vmatprep.subr.mxu0 0.0
    %200 = vmatpush2.xpose.msra.mxu0 0.0
    %201 = vmatprep.subr.mxu0 0.0
    %202 = vmatpush2.xpose.msra.mxu0 0.0
    %203 = vmatprep.subr.mxu0 0.0
    %204 = vmatpush2.xpose.msra.mxu0 0.0
    %205 = vmatprep.subr.mxu0 0.0
    %206 = vmatpush2.xpose.msra.mxu0 0.0
    %207 = vmatprep.subr.mxu0 0.0
    %208 = vmatpush2.xpose.msra.mxu0 0.0
    %209 = vmatprep.subr.mxu0 0.0
    %210 = vmatpush2.xpose.msra.mxu0 0.0
    %211 = vmatprep.subr.mxu0 0.0
    %212 = vmatpush2.xpose.msra.mxu0 0.0
    %213 = vmatprep.subr.mxu0 0.0
    %214 = vmatpush2.xpose.msra.mxu0 0.0
    %215 = vmatprep.subr.mxu0 0.0
    %216 = vmatpush2.xpose.msra.mxu0 0.0
    %217 = vmatprep.subr.mxu0 0.0
    %218 = vmatpush2.xpose.msra.mxu0 0.0
    %219 = vmatprep.subr.mxu0 0.0
    %220 = vmatpush2.xpose.msra.mxu0 0.0
    %221 = vmatprep.subr.mxu0 0.0
    %222 = vmatpush2.xpose.msra.mxu0 0.0
    %223 = vmatprep.subr.mxu0 0.0
    %224 = vmatpush2.xpose.msra.mxu0 0.0
    %225 = vmatprep.subr.mxu0 0.0
    %226 = vmatpush2.xpose.msra.mxu0 0.0
    %227 = vmatprep.subr.mxu0 0.0
    %228 = vmatpush2.xpose.msra.mxu0 0.0
    %229 = vmatprep.mubr.f32.mxu0 0.0
    %230 = vmatmul.mubr.f32.gmra.mxu0 %v161
    %v231 = vpop.f32.mrf.mxu0
    %v232 = vadd.f32 0.0, %v231
    %v233 = vpop.f32.mrf.mxu0
    %234 = vdwg.mxu0
    %236 = vrot.lane.b32.xlu0 %v149, 96
    %v237 = vpop.permute.xlu0 %236
    %v238 = vsel %vm160, %v149, 0
    %v240 = vsel %vm160, %v237, 0
    %242 = vmatprep.subr.mxu0 0.0
    %243 = vmatpush1.xpose.msra.mxu0 0.0
    %244 = vmatprep.subr.mxu0 0.0
    %245 = vmatpush1.xpose.msra.mxu0 0.0
    %246 = vmatprep.subr.mxu0 0.0
    %247 = vmatpush1.xpose.msra.mxu0 0.0
    %248 = vmatprep.subr.mxu0 0.0
    %249 = vmatpush1.xpose.msra.mxu0 0.0
    %250 = vmatprep.subr.mxu0 0.0
    %251 = vmatpush1.xpose.msra.mxu0 0.0
    %252 = vmatprep.subr.mxu0 0.0
    %253 = vmatpush1.xpose.msra.mxu0 0.0
    %254 = vmatprep.subr.mxu0 0.0
    %255 = vmatpush1.xpose.msra.mxu0 0.0
    %256 = vmatprep.subr.mxu0 0.0
    %257 = vmatpush1.xpose.msra.mxu0 0.0
    %258 = vmatprep.subr.mxu0 0.0
    %259 = vmatpush1.xpose.msra.mxu0 0.0
    %260 = vmatprep.subr.mxu0 0.0
    %261 = vmatpush1.xpose.msra.mxu0 0.0
    %262 = vmatprep.subr.mxu0 0.0
    %263 = vmatpush1.xpose.msra.mxu0 0.0
    %264 = vmatprep.subr.mxu0 0.0
    %265 = vmatpush1.xpose.msra.mxu0 0.0
    %266 = vmatprep.subr.mxu0 0.0
    %267 = vmatpush1.xpose.msra.mxu0 0.0
    %268 = vmatprep.subr.mxu0 0.0
    %269 = vmatpush1.xpose.msra.mxu0 0.0
    %270 = vmatprep.subr.mxu0 0.0
    %271 = vmatpush1.xpose.msra.mxu0 0.0
    %272 = vmatprep.subr.mxu0 0.0
    %273 = vmatpush1.xpose.msra.mxu0 %v240
    %274 = vmatprep.subr.mxu0 0.0
    %275 = vmatpush2.xpose.msra.mxu0 0.0
    %276 = vmatprep.subr.mxu0 0.0
    %277 = vmatpush2.xpose.msra.mxu0 0.0
    %278 = vmatprep.subr.mxu0 0.0
    %279 = vmatpush2.xpose.msra.mxu0 0.0
    %280 = vmatprep.subr.mxu0 0.0
    %281 = vmatpush2.xpose.msra.mxu0 0.0
    %282 = vmatprep.subr.mxu0 0.0
    %283 = vmatpush2.xpose.msra.mxu0 0.0
    %284 = vmatprep.subr.mxu0 0.0
    %285 = vmatpush2.xpose.msra.mxu0 0.0
    %286 = vmatprep.subr.mxu0 0.0
    %287 = vmatpush2.xpose.msra.mxu0 0.0
    %288 = vmatprep.subr.mxu0 0.0
    %289 = vmatpush2.xpose.msra.mxu0 0.0
    %290 = vmatprep.subr.mxu0 0.0
    %291 = vmatpush2.xpose.msra.mxu0 0.0
    %292 = vmatprep.subr.mxu0 0.0
    %293 = vmatpush2.xpose.msra.mxu0 0.0
    %294 = vmatprep.subr.mxu0 0.0
    %295 = vmatpush2.xpose.msra.mxu0 0.0
    %296 = vmatprep.subr.mxu0 0.0
    %297 = vmatpush2.xpose.msra.mxu0 0.0
    %298 = vmatprep.subr.mxu0 0.0
    %299 = vmatpush2.xpose.msra.mxu0 0.0
    %300 = vmatprep.subr.mxu0 0.0
    %301 = vmatpush2.xpose.msra.mxu0 0.0
    %302 = vmatprep.subr.mxu0 0.0
    %303 = vmatpush2.xpose.msra.mxu0 0.0
    %304 = vmatprep.subr.mxu0 0.0
    %305 = vmatpush2.xpose.msra.mxu0 0.0
    %306 = vmatprep.mubr.f32.mxu0 0.0
    %307 = vmatmul.mubr.f32.gmra.mxu0 %v238
    %v308 = vpop.f32.mrf.mxu0
    %v309 = vadd.f32 0.0, %v308
    %v310 = vpop.f32.mrf.mxu0
    %311 = vdwg.mxu0
    %v312 = vmul.f32 %v232, 0.17677669
    %v313 = vmul.f32 %v309, 0.17677669
    %v314 = vsel %vm156, 1, 0
    %vm315 = vcmp.eq.s32.totalorder %v314, 1
    %v316 = vsel %vm315, %v312, 1e-09
    %v317 = vsel %vm315, %v313, 1e-09
    %v318 = vsel %vm160, %v316, -inf
    %319 = vmax.xlane.f32.xlu0 %v318
    %v320 = vpop.xlane.xlu0 %319
    %v321 = vsel %vm160, %v317, -inf
    %322 = vmax.xlane.f32.xlu0 %v321
    %v323 = vpop.xlane.xlu0 %322
    %v324 = vsub.f32 %v316, %v320
    %v325 = vsub.f32 %v317, %v323
    %v326 = vmul.f32 %v324, 1.442695
    %v327 = vpow.pop %v326
    %v328 = vmul.f32 %v325, 1.442695
    %v329 = vpow.pop %v328
    %v330 = vsel %vm160, %v327, 0.0
    %331 = vadd.xlane.f32.xlu0 %v330
    %v332 = vpop.xlane.xlu0 %331
    %v333 = vsel %vm160, %v329, 0.0
    %334 = vadd.xlane.f32.xlu0 %v333
    %v335 = vpop.xlane.xlu0 %334
    %v336 = vrcp.pop %v332
    %v337 = vrcp.pop %v335
    %v338 = vmul.f32 %v327, %v336
    %v339 = vmul.f32 %v329, %v337
    %340 = vrot.lane.b32.xlu0 %v144, 64
    %v341 = vpop.permute.xlu0 %340
    %v344 = vsel %vm160, %v338, 0
    %346 = vmatprep.subr.mxu0 0.0
    %347 = vmatpush1.msra.mxu0 0.0
    %348 = vmatprep.subr.mxu0 0.0
    %349 = vmatpush1.msra.mxu0 0.0
    %350 = vmatprep.subr.mxu0 0.0
    %351 = vmatpush1.msra.mxu0 0.0
    %352 = vmatprep.subr.mxu0 0.0
    %353 = vmatpush1.msra.mxu0 0.0
    %354 = vmatprep.subr.mxu0 0.0
    %355 = vmatpush1.msra.mxu0 0.0
    %356 = vmatprep.subr.mxu0 0.0
    %357 = vmatpush1.msra.mxu0 0.0
    %358 = vmatprep.subr.mxu0 0.0
    %359 = vmatpush1.msra.mxu0 0.0
    %360 = vmatprep.subr.mxu0 0.0
    %361 = vmatpush1.msra.mxu0 0.0
    %362 = vmatprep.subr.mxu0 0.0
    %363 = vmatpush1.msra.mxu0 0.0
    %364 = vmatprep.subr.mxu0 0.0
    %365 = vmatpush1.msra.mxu0 0.0
    %366 = vmatprep.subr.mxu0 0.0
    %367 = vmatpush1.msra.mxu0 0.0
    %368 = vmatprep.subr.mxu0 0.0
    %369 = vmatpush1.msra.mxu0 0.0
    %370 = vmatprep.subr.mxu0 0.0
    %371 = vmatpush1.msra.mxu0 0.0
    %372 = vmatprep.subr.mxu0 0.0
    %373 = vmatpush1.msra.mxu0 0.0
    %374 = vmatprep.subr.mxu0 0.0
    %375 = vmatpush1.msra.mxu0 0.0
    %376 = vmatprep.subr.mxu0 0.0
    %377 = vmatpush1.msra.mxu0 %v341
    %378 = vmatprep.subr.mxu0 0.0
    %379 = vmatpush2.msra.mxu0 0.0
    %380 = vmatprep.subr.mxu0 0.0
    %381 = vmatpush2.msra.mxu0 0.0
    %382 = vmatprep.subr.mxu0 0.0
    %383 = vmatpush2.msra.mxu0 0.0
    %384 = vmatprep.subr.mxu0 0.0
    %385 = vmatpush2.msra.mxu0 0.0
    %386 = vmatprep.subr.mxu0 0.0
    %387 = vmatpush2.msra.mxu0 0.0
    %388 = vmatprep.subr.mxu0 0.0
    %389 = vmatpush2.msra.mxu0 0.0
    %390 = vmatprep.subr.mxu0 0.0
    %391 = vmatpush2.msra.mxu0 0.0
    %392 = vmatprep.subr.mxu0 0.0
    %393 = vmatpush2.msra.mxu0 0.0
    %394 = vmatprep.subr.mxu0 0.0
    %395 = vmatpush2.msra.mxu0 0.0
    %396 = vmatprep.subr.mxu0 0.0
    %397 = vmatpush2.msra.mxu0 0.0
    %398 = vmatprep.subr.mxu0 0.0
    %399 = vmatpush2.msra.mxu0 0.0
    %400 = vmatprep.subr.mxu0 0.0
    %401 = vmatpush2.msra.mxu0 0.0
    %402 = vmatprep.subr.mxu0 0.0
    %403 = vmatpush2.msra.mxu0 0.0
    %404 = vmatprep.subr.mxu0 0.0
    %405 = vmatpush2.msra.mxu0 0.0
    %406 = vmatprep.subr.mxu0 0.0
    %407 = vmatpush2.msra.mxu0 0.0
    %408 = vmatprep.subr.mxu0 0.0
    %409 = vmatpush2.msra.mxu0 0.0
    %410 = vmatprep.mubr.f32.mxu0 0.0
    %411 = vmatmul.mubr.f32.gmra.mxu0 %v344
    %v412 = vpop.f32.mrf.mxu0
    %v413 = vadd.f32 0.0, %v412
    %v414 = vpop.f32.mrf.mxu0
    %415 = vdwg.mxu0
    %416 = vrot.lane.b32.xlu0 %v149, 64
    %v417 = vpop.permute.xlu0 %416
    %v420 = vsel %vm160, %v339, 0
    %422 = vmatprep.subr.mxu0 0.0
    %423 = vmatpush1.msra.mxu0 0.0
    %424 = vmatprep.subr.mxu0 0.0
    %425 = vmatpush1.msra.mxu0 0.0
    %426 = vmatprep.subr.mxu0 0.0
    %427 = vmatpush1.msra.mxu0 0.0
    %428 = vmatprep.subr.mxu0 0.0
    %429 = vmatpush1.msra.mxu0 0.0
    %430 = vmatprep.subr.mxu0 0.0
    %431 = vmatpush1.msra.mxu0 0.0
    %432 = vmatprep.subr.mxu0 0.0
    %433 = vmatpush1.msra.mxu0 0.0
    %434 = vmatprep.subr.mxu0 0.0
    %435 = vmatpush1.msra.mxu0 0.0
    %436 = vmatprep.subr.mxu0 0.0
    %437 = vmatpush1.msra.mxu0 0.0
    %438 = vmatprep.subr.mxu0 0.0
    %439 = vmatpush1.msra.mxu0 0.0
    %440 = vmatprep.subr.mxu0 0.0
    %441 = vmatpush1.msra.mxu0 0.0
    %442 = vmatprep.subr.mxu0 0.0
    %443 = vmatpush1.msra.mxu0 0.0
    %444 = vmatprep.subr.mxu0 0.0
    %445 = vmatpush1.msra.mxu0 0.0
    %446 = vmatprep.subr.mxu0 0.0
    %447 = vmatpush1.msra.mxu0 0.0
    %448 = vmatprep.subr.mxu0 0.0
    %449 = vmatpush1.msra.mxu0 0.0
    %450 = vmatprep.subr.mxu0 0.0
    %451 = vmatpush1.msra.mxu0 0.0
    %452 = vmatprep.subr.mxu0 0.0
    %453 = vmatpush1.msra.mxu0 %v417
    %454 = vmatprep.subr.mxu0 0.0
    %455 = vmatpush2.msra.mxu0 0.0
    %456 = vmatprep.subr.mxu0 0.0
    %457 = vmatpush2.msra.mxu0 0.0
    %458 = vmatprep.subr.mxu0 0.0
    %459 = vmatpush2.msra.mxu0 0.0
    %460 = vmatprep.subr.mxu0 0.0
    %461 = vmatpush2.msra.mxu0 0.0
    %462 = vmatprep.subr.mxu0 0.0
    %463 = vmatpush2.msra.mxu0 0.0
    %464 = vmatprep.subr.mxu0 0.0
    %465 = vmatpush2.msra.mxu0 0.0
    %466 = vmatprep.subr.mxu0 0.0
    %467 = vmatpush2.msra.mxu0 0.0
    %468 = vmatprep.subr.mxu0 0.0
    %469 = vmatpush2.msra.mxu0 0.0
    %470 = vmatprep.subr.mxu0 0.0
    %471 = vmatpush2.msra.mxu0 0.0
    %472 = vmatprep.subr.mxu0 0.0
    %473 = vmatpush2.msra.mxu0 0.0
    %474 = vmatprep.subr.mxu0 0.0
    %475 = vmatpush2.msra.mxu0 0.0
    %476 = vmatprep.subr.mxu0 0.0
    %477 = vmatpush2.msra.mxu0 0.0
    %478 = vmatprep.subr.mxu0 0.0
    %479 = vmatpush2.msra.mxu0 0.0
    %480 = vmatprep.subr.mxu0 0.0
    %481 = vmatpush2.msra.mxu0 0.0
    %482 = vmatprep.subr.mxu0 0.0
    %483 = vmatpush2.msra.mxu0 0.0
    %484 = vmatprep.subr.mxu0 0.0
    %485 = vmatpush2.msra.mxu0 0.0
    %486 = vmatprep.mubr.f32.mxu0 0.0
    %487 = vmatmul.mubr.f32.gmra.mxu0 %v420
    %v488 = vpop.f32.mrf.mxu0
    %v489 = vadd.f32 0.0, %v488
    %v490 = vpop.f32.mrf.mxu0
    %491 = vdwg.mxu0
    %492 = vrot.lane.b32.xlu0 %v144, 120
    %v493 = vpop.permute.xlu0 %492
    %494 = vrot.lane.b32.xlu0 %v144, 88
    %v495 = vpop.permute.xlu0 %494
    %v496 = vsel %vm160, %v493, 0
    %v498 = vsel %vm160, %v495, 0
    %500 = vmatprep.subr.mxu0 0.0
    %501 = vmatpush1.xpose.msra.mxu0 0.0
    %502 = vmatprep.subr.mxu0 0.0
    %503 = vmatpush1.xpose.msra.mxu0 0.0
    %504 = vmatprep.subr.mxu0 0.0
    %505 = vmatpush1.xpose.msra.mxu0 0.0
    %506 = vmatprep.subr.mxu0 0.0
    %507 = vmatpush1.xpose.msra.mxu0 0.0
    %508 = vmatprep.subr.mxu0 0.0
    %509 = vmatpush1.xpose.msra.mxu0 0.0
    %510 = vmatprep.subr.mxu0 0.0
    %511 = vmatpush1.xpose.msra.mxu0 0.0
    %512 = vmatprep.subr.mxu0 0.0
    %513 = vmatpush1.xpose.msra.mxu0 0.0
    %514 = vmatprep.subr.mxu0 0.0
    %515 = vmatpush1.xpose.msra.mxu0 0.0
    %516 = vmatprep.subr.mxu0 0.0
    %517 = vmatpush1.xpose.msra.mxu0 0.0
    %518 = vmatprep.subr.mxu0 0.0
    %519 = vmatpush1.xpose.msra.mxu0 0.0
    %520 = vmatprep.subr.mxu0 0.0
    %521 = vmatpush1.xpose.msra.mxu0 0.0
    %522 = vmatprep.subr.mxu0 0.0
    %523 = vmatpush1.xpose.msra.mxu0 0.0
    %524 = vmatprep.subr.mxu0 0.0
    %525 = vmatpush1.xpose.msra.mxu0 0.0
    %526 = vmatprep.subr.mxu0 0.0
    %527 = vmatpush1.xpose.msra.mxu0 0.0
    %528 = vmatprep.subr.mxu0 0.0
    %529 = vmatpush1.xpose.msra.mxu0 0.0
    %530 = vmatprep.subr.mxu0 0.0
    %531 = vmatpush1.xpose.msra.mxu0 %v498
    %532 = vmatprep.subr.mxu0 0.0
    %533 = vmatpush2.xpose.msra.mxu0 0.0
    %534 = vmatprep.subr.mxu0 0.0
    %535 = vmatpush2.xpose.msra.mxu0 0.0
    %536 = vmatprep.subr.mxu0 0.0
    %537 = vmatpush2.xpose.msra.mxu0 0.0
    %538 = vmatprep.subr.mxu0 0.0
    %539 = vmatpush2.xpose.msra.mxu0 0.0
    %540 = vmatprep.subr.mxu0 0.0
    %541 = vmatpush2.xpose.msra.mxu0 0.0
    %542 = vmatprep.subr.mxu0 0.0
    %543 = vmatpush2.xpose.msra.mxu0 0.0
    %544 = vmatprep.subr.mxu0 0.0
    %545 = vmatpush2.xpose.msra.mxu0 0.0
    %546 = vmatprep.subr.mxu0 0.0
    %547 = vmatpush2.xpose.msra.mxu0 0.0
    %548 = vmatprep.subr.mxu0 0.0
    %549 = vmatpush2.xpose.msra.mxu0 0.0
    %550 = vmatprep.subr.mxu0 0.0
    %551 = vmatpush2.xpose.msra.mxu0 0.0
    %552 = vmatprep.subr.mxu0 0.0
    %553 = vmatpush2.xpose.msra.mxu0 0.0
    %554 = vmatprep.subr.mxu0 0.0
    %555 = vmatpush2.xpose.msra.mxu0 0.0
    %556 = vmatprep.subr.mxu0 0.0
    %557 = vmatpush2.xpose.msra.mxu0 0.0
    %558 = vmatprep.subr.mxu0 0.0
    %559 = vmatpush2.xpose.msra.mxu0 0.0
    %560 = vmatprep.subr.mxu0 0.0
    %561 = vmatpush2.xpose.msra.mxu0 0.0
    %562 = vmatprep.subr.mxu0 0.0
    %563 = vmatpush2.xpose.msra.mxu0 0.0
    %564 = vmatprep.mubr.f32.mxu0 0.0
    %565 = vmatmul.mubr.f32.gmra.mxu0 %v496
    %v566 = vpop.f32.mrf.mxu0
    %v567 = vadd.f32 0.0, %v566
    %v568 = vpop.f32.mrf.mxu0
    %569 = vdwg.mxu0
    %570 = vrot.lane.b32.xlu0 %v149, 120
    %v571 = vpop.permute.xlu0 %570
    %572 = vrot.lane.b32.xlu0 %v149, 88
    %v573 = vpop.permute.xlu0 %572
    %v574 = vsel %vm160, %v571, 0
    %v576 = vsel %vm160, %v573, 0
    %578 = vmatprep.subr.mxu0 0.0
    %579 = vmatpush1.xpose.msra.mxu0 0.0
    %580 = vmatprep.subr.mxu0 0.0
    %581 = vmatpush1.xpose.msra.mxu0 0.0
    %582 = vmatprep.subr.mxu0 0.0
    %583 = vmatpush1.xpose.msra.mxu0 0.0
    %584 = vmatprep.subr.mxu0 0.0
    %585 = vmatpush1.xpose.msra.mxu0 0.0
    %586 = vmatprep.subr.mxu0 0.0
    %587 = vmatpush1.xpose.msra.mxu0 0.0
    %588 = vmatprep.subr.mxu0 0.0
    %589 = vmatpush1.xpose.msra.mxu0 0.0
    %590 = vmatprep.subr.mxu0 0.0
    %591 = vmatpush1.xpose.msra.mxu0 0.0
    %592 = vmatprep.subr.mxu0 0.0
    %593 = vmatpush1.xpose.msra.mxu0 0.0
    %594 = vmatprep.subr.mxu0 0.0
    %595 = vmatpush1.xpose.msra.mxu0 0.0
    %596 = vmatprep.subr.mxu0 0.0
    %597 = vmatpush1.xpose.msra.mxu0 0.0
    %598 = vmatprep.subr.mxu0 0.0
    %599 = vmatpush1.xpose.msra.mxu0 0.0
    %600 = vmatprep.subr.mxu0 0.0
    %601 = vmatpush1.xpose.msra.mxu0 0.0
    %602 = vmatprep.subr.mxu0 0.0
    %603 = vmatpush1.xpose.msra.mxu0 0.0
    %604 = vmatprep.subr.mxu0 0.0
    %605 = vmatpush1.xpose.msra.mxu0 0.0
    %606 = vmatprep.subr.mxu0 0.0
    %607 = vmatpush1.xpose.msra.mxu0 0.0
    %608 = vmatprep.subr.mxu0 0.0
    %609 = vmatpush1.xpose.msra.mxu0 %v576
    %610 = vmatprep.subr.mxu0 0.0
    %611 = vmatpush2.xpose.msra.mxu0 0.0
    %612 = vmatprep.subr.mxu0 0.0
    %613 = vmatpush2.xpose.msra.mxu0 0.0
    %614 = vmatprep.subr.mxu0 0.0
    %615 = vmatpush2.xpose.msra.mxu0 0.0
    %616 = vmatprep.subr.mxu0 0.0
    %617 = vmatpush2.xpose.msra.mxu0 0.0
    %618 = vmatprep.subr.mxu0 0.0
    %619 = vmatpush2.xpose.msra.mxu0 0.0
    %620 = vmatprep.subr.mxu0 0.0
    %621 = vmatpush2.xpose.msra.mxu0 0.0
    %622 = vmatprep.subr.mxu0 0.0
    %623 = vmatpush2.xpose.msra.mxu0 0.0
    %624 = vmatprep.subr.mxu0 0.0
    %625 = vmatpush2.xpose.msra.mxu0 0.0
    %626 = vmatprep.subr.mxu0 0.0
    %627 = vmatpush2.xpose.msra.mxu0 0.0
    %628 = vmatprep.subr.mxu0 0.0
    %629 = vmatpush2.xpose.msra.mxu0 0.0
    %630 = vmatprep.subr.mxu0 0.0
    %631 = vmatpush2.xpose.msra.mxu0 0.0
    %632 = vmatprep.subr.mxu0 0.0
    %633 = vmatpush2.xpose.msra.mxu0 0.0
    %634 = vmatprep.subr.mxu0 0.0
    %635 = vmatpush2.xpose.msra.mxu0 0.0
    %636 = vmatprep.subr.mxu0 0.0
    %637 = vmatpush2.xpose.msra.mxu0 0.0
    %638 = vmatprep.subr.mxu0 0.0
    %639 = vmatpush2.xpose.msra.mxu0 0.0
    %640 = vmatprep.subr.mxu0 0.0
    %641 = vmatpush2.xpose.msra.mxu0 0.0
    %642 = vmatprep.mubr.f32.mxu0 0.0
    %643 = vmatmul.mubr.f32.gmra.mxu0 %v574
    %v644 = vpop.f32.mrf.mxu0
    %v645 = vadd.f32 0.0, %v644
    %v646 = vpop.f32.mrf.mxu0
    %647 = vdwg.mxu0
    %v648 = vmul.f32 %v567, 0.17677669
    %v649 = vmul.f32 %v645, 0.17677669
    %v650 = vsel %vm315, %v648, 1e-09
    %v651 = vsel %vm315, %v649, 1e-09
    %v652 = vsel %vm160, %v650, -inf
    %653 = vmax.xlane.f32.xlu0 %v652
    %v654 = vpop.xlane.xlu0 %653
    %v655 = vsel %vm160, %v651, -inf
    %656 = vmax.xlane.f32.xlu0 %v655
    %v657 = vpop.xlane.xlu0 %656
    %v658 = vsub.f32 %v650, %v654
    %v659 = vsub.f32 %v651, %v657
    %v660 = vmul.f32 %v658, 1.442695
    %v661 = vpow.pop %v660
    %v662 = vmul.f32 %v659, 1.442695
    %v663 = vpow.pop %v662
    %v664 = vsel %vm160, %v661, 0.0
    %665 = vadd.xlane.f32.xlu0 %v664
    %v666 = vpop.xlane.xlu0 %665
    %v667 = vsel %vm160, %v663, 0.0
    %668 = vadd.xlane.f32.xlu0 %v667
    %v669 = vpop.xlane.xlu0 %668
    %v670 = vrcp.pop %v666
    %v671 = vrcp.pop %v669
    %v672 = vmul.f32 %v661, %v670
    %v673 = vmul.f32 %v663, %v671
    %674 = vrot.lane.b32.xlu0 %v144, 56
    %v675 = vpop.permute.xlu0 %674
    %v678 = vsel %vm160, %v672, 0
    %680 = vmatprep.subr.mxu0 0.0
    %681 = vmatpush1.msra.mxu0 0.0
    %682 = vmatprep.subr.mxu0 0.0
    %683 = vmatpush1.msra.mxu0 0.0
    %684 = vmatprep.subr.mxu0 0.0
    %685 = vmatpush1.msra.mxu0 0.0
    %686 = vmatprep.subr.mxu0 0.0
    %687 = vmatpush1.msra.mxu0 0.0
    %688 = vmatprep.subr.mxu0 0.0
    %689 = vmatpush1.msra.mxu0 0.0
    %690 = vmatprep.subr.mxu0 0.0
    %691 = vmatpush1.msra.mxu0 0.0
    %692 = vmatprep.subr.mxu0 0.0
    %693 = vmatpush1.msra.mxu0 0.0
    %694 = vmatprep.subr.mxu0 0.0
    %695 = vmatpush1.msra.mxu0 0.0
    %696 = vmatprep.subr.mxu0 0.0
    %697 = vmatpush1.msra.mxu0 0.0
    %698 = vmatprep.subr.mxu0 0.0
    %699 = vmatpush1.msra.mxu0 0.0
    %700 = vmatprep.subr.mxu0 0.0
    %701 = vmatpush1.msra.mxu0 0.0
    %702 = vmatprep.subr.mxu0 0.0
    %703 = vmatpush1.msra.mxu0 0.0
    %704 = vmatprep.subr.mxu0 0.0
    %705 = vmatpush1.msra.mxu0 0.0
    %706 = vmatprep.subr.mxu0 0.0
    %707 = vmatpush1.msra.mxu0 0.0
    %708 = vmatprep.subr.mxu0 0.0
    %709 = vmatpush1.msra.mxu0 0.0
    %710 = vmatprep.subr.mxu0 0.0
    %711 = vmatpush1.msra.mxu0 %v675
    %712 = vmatprep.subr.mxu0 0.0
    %713 = vmatpush2.msra.mxu0 0.0
    %714 = vmatprep.subr.mxu0 0.0
    %715 = vmatpush2.msra.mxu0 0.0
    %716 = vmatprep.subr.mxu0 0.0
    %717 = vmatpush2.msra.mxu0 0.0
    %718 = vmatprep.subr.mxu0 0.0
    %719 = vmatpush2.msra.mxu0 0.0
    %720 = vmatprep.subr.mxu0 0.0
    %721 = vmatpush2.msra.mxu0 0.0
    %722 = vmatprep.subr.mxu0 0.0
    %723 = vmatpush2.msra.mxu0 0.0
    %724 = vmatprep.subr.mxu0 0.0
    %725 = vmatpush2.msra.mxu0 0.0
    %726 = vmatprep.subr.mxu0 0.0
    %727 = vmatpush2.msra.mxu0 0.0
    %728 = vmatprep.subr.mxu0 0.0
    %729 = vmatpush2.msra.mxu0 0.0
    %730 = vmatprep.subr.mxu0 0.0
    %731 = vmatpush2.msra.mxu0 0.0
    %732 = vmatprep.subr.mxu0 0.0
    %733 = vmatpush2.msra.mxu0 0.0
    %734 = vmatprep.subr.mxu0 0.0
    %735 = vmatpush2.msra.mxu0 0.0
    %736 = vmatprep.subr.mxu0 0.0
    %737 = vmatpush2.msra.mxu0 0.0
    %738 = vmatprep.subr.mxu0 0.0
    %739 = vmatpush2.msra.mxu0 0.0
    %740 = vmatprep.subr.mxu0 0.0
    %741 = vmatpush2.msra.mxu0 0.0
    %742 = vmatprep.subr.mxu0 0.0
    %743 = vmatpush2.msra.mxu0 0.0
    %744 = vmatprep.mubr.f32.mxu0 0.0
    %745 = vmatmul.mubr.f32.gmra.mxu0 %v678
    %v746 = vpop.f32.mrf.mxu0
    %v747 = vadd.f32 0.0, %v746
    %v748 = vpop.f32.mrf.mxu0
    %749 = vdwg.mxu0
    %750 = vrot.lane.b32.xlu0 %v149, 56
    %v751 = vpop.permute.xlu0 %750
    %v754 = vsel %vm160, %v673, 0
    %756 = vmatprep.subr.mxu0 0.0
    %757 = vmatpush1.msra.mxu0 0.0
    %758 = vmatprep.subr.mxu0 0.0
    %759 = vmatpush1.msra.mxu0 0.0
    %760 = vmatprep.subr.mxu0 0.0
    %761 = vmatpush1.msra.mxu0 0.0
    %762 = vmatprep.subr.mxu0 0.0
    %763 = vmatpush1.msra.mxu0 0.0
    %764 = vmatprep.subr.mxu0 0.0
    %765 = vmatpush1.msra.mxu0 0.0
    %766 = vmatprep.subr.mxu0 0.0
    %767 = vmatpush1.msra.mxu0 0.0
    %768 = vmatprep.subr.mxu0 0.0
    %769 = vmatpush1.msra.mxu0 0.0
    %770 = vmatprep.subr.mxu0 0.0
    %771 = vmatpush1.msra.mxu0 0.0
    %772 = vmatprep.subr.mxu0 0.0
    %773 = vmatpush1.msra.mxu0 0.0
    %774 = vmatprep.subr.mxu0 0.0
    %775 = vmatpush1.msra.mxu0 0.0
    %776 = vmatprep.subr.mxu0 0.0
    %777 = vmatpush1.msra.mxu0 0.0
    %778 = vmatprep.subr.mxu0 0.0
    %779 = vmatpush1.msra.mxu0 0.0
    %780 = vmatprep.subr.mxu0 0.0
    %781 = vmatpush1.msra.mxu0 0.0
    %782 = vmatprep.subr.mxu0 0.0
    %783 = vmatpush1.msra.mxu0 0.0
    %784 = vmatprep.subr.mxu0 0.0
    %785 = vmatpush1.msra.mxu0 0.0
    %786 = vmatprep.subr.mxu0 0.0
    %787 = vmatpush1.msra.mxu0 %v751
    %788 = vmatprep.subr.mxu0 0.0
    %789 = vmatpush2.msra.mxu0 0.0
    %790 = vmatprep.subr.mxu0 0.0
    %791 = vmatpush2.msra.mxu0 0.0
    %792 = vmatprep.subr.mxu0 0.0
    %793 = vmatpush2.msra.mxu0 0.0
    %794 = vmatprep.subr.mxu0 0.0
    %795 = vmatpush2.msra.mxu0 0.0
    %796 = vmatprep.subr.mxu0 0.0
    %797 = vmatpush2.msra.mxu0 0.0
    %798 = vmatprep.subr.mxu0 0.0
    %799 = vmatpush2.msra.mxu0 0.0
    %800 = vmatprep.subr.mxu0 0.0
    %801 = vmatpush2.msra.mxu0 0.0
    %802 = vmatprep.subr.mxu0 0.0
    %803 = vmatpush2.msra.mxu0 0.0
    %804 = vmatprep.subr.mxu0 0.0
    %805 = vmatpush2.msra.mxu0 0.0
    %806 = vmatprep.subr.mxu0 0.0
    %807 = vmatpush2.msra.mxu0 0.0
    %808 = vmatprep.subr.mxu0 0.0
    %809 = vmatpush2.msra.mxu0 0.0
    %810 = vmatprep.subr.mxu0 0.0
    %811 = vmatpush2.msra.mxu0 0.0
    %812 = vmatprep.subr.mxu0 0.0
    %813 = vmatpush2.msra.mxu0 0.0
    %814 = vmatprep.subr.mxu0 0.0
    %815 = vmatpush2.msra.mxu0 0.0
    %816 = vmatprep.subr.mxu0 0.0
    %817 = vmatpush2.msra.mxu0 0.0
    %818 = vmatprep.subr.mxu0 0.0
    %819 = vmatpush2.msra.mxu0 0.0
    %820 = vmatprep.mubr.f32.mxu0 0.0
    %821 = vmatmul.mubr.f32.gmra.mxu0 %v754
    %v822 = vpop.f32.mrf.mxu0
    %v823 = vadd.f32 0.0, %v822
    %v824 = vpop.f32.mrf.mxu0
    %825 = vdwg.mxu0
    %826 = vrot.lane.b32.xlu0 %v144, 112
    %v827 = vpop.permute.xlu0 %826
    %828 = vrot.lane.b32.xlu0 %v144, 80
    %v829 = vpop.permute.xlu0 %828
    %v830 = vsel %vm160, %v827, 0
    %v832 = vsel %vm160, %v829, 0
    %834 = vmatprep.subr.mxu0 0.0
    %835 = vmatpush1.xpose.msra.mxu0 0.0
    %836 = vmatprep.subr.mxu0 0.0
    %837 = vmatpush1.xpose.msra.mxu0 0.0
    %838 = vmatprep.subr.mxu0 0.0
    %839 = vmatpush1.xpose.msra.mxu0 0.0
    %840 = vmatprep.subr.mxu0 0.0
    %841 = vmatpush1.xpose.msra.mxu0 0.0
    %842 = vmatprep.subr.mxu0 0.0
    %843 = vmatpush1.xpose.msra.mxu0 0.0
    %844 = vmatprep.subr.mxu0 0.0
    %845 = vmatpush1.xpose.msra.mxu0 0.0
    %846 = vmatprep.subr.mxu0 0.0
    %847 = vmatpush1.xpose.msra.mxu0 0.0
    %848 = vmatprep.subr.mxu0 0.0
    %849 = vmatpush1.xpose.msra.mxu0 0.0
    %850 = vmatprep.subr.mxu0 0.0
    %851 = vmatpush1.xpose.msra.mxu0 0.0
    %852 = vmatprep.subr.mxu0 0.0
    %853 = vmatpush1.xpose.msra.mxu0 0.0
    %854 = vmatprep.subr.mxu0 0.0
    %855 = vmatpush1.xpose.msra.mxu0 0.0
    %856 = vmatprep.subr.mxu0 0.0
    %857 = vmatpush1.xpose.msra.mxu0 0.0
    %858 = vmatprep.subr.mxu0 0.0
    %859 = vmatpush1.xpose.msra.mxu0 0.0
    %860 = vmatprep.subr.mxu0 0.0
    %861 = vmatpush1.xpose.msra.mxu0 0.0
    %862 = vmatprep.subr.mxu0 0.0
    %863 = vmatpush1.xpose.msra.mxu0 0.0
    %864 = vmatprep.subr.mxu0 0.0
    %865 = vmatpush1.xpose.msra.mxu0 %v832
    %866 = vmatprep.subr.mxu0 0.0
    %867 = vmatpush2.xpose.msra.mxu0 0.0
    %868 = vmatprep.subr.mxu0 0.0
    %869 = vmatpush2.xpose.msra.mxu0 0.0
    %870 = vmatprep.subr.mxu0 0.0
    %871 = vmatpush2.xpose.msra.mxu0 0.0
    %872 = vmatprep.subr.mxu0 0.0
    %873 = vmatpush2.xpose.msra.mxu0 0.0
    %874 = vmatprep.subr.mxu0 0.0
    %875 = vmatpush2.xpose.msra.mxu0 0.0
    %876 = vmatprep.subr.mxu0 0.0
    %877 = vmatpush2.xpose.msra.mxu0 0.0
    %878 = vmatprep.subr.mxu0 0.0
    %879 = vmatpush2.xpose.msra.mxu0 0.0
    %880 = vmatprep.subr.mxu0 0.0
    %881 = vmatpush2.xpose.msra.mxu0 0.0
    %882 = vmatprep.subr.mxu0 0.0
    %883 = vmatpush2.xpose.msra.mxu0 0.0
    %884 = vmatprep.subr.mxu0 0.0
    %885 = vmatpush2.xpose.msra.mxu0 0.0
    %886 = vmatprep.subr.mxu0 0.0
    %887 = vmatpush2.xpose.msra.mxu0 0.0
    %888 = vmatprep.subr.mxu0 0.0
    %889 = vmatpush2.xpose.msra.mxu0 0.0
    %890 = vmatprep.subr.mxu0 0.0
    %891 = vmatpush2.xpose.msra.mxu0 0.0
    %892 = vmatprep.subr.mxu0 0.0
    %893 = vmatpush2.xpose.msra.mxu0 0.0
    %894 = vmatprep.subr.mxu0 0.0
    %895 = vmatpush2.xpose.msra.mxu0 0.0
    %896 = vmatprep.subr.mxu0 0.0
    %897 = vmatpush2.xpose.msra.mxu0 0.0
    %898 = vmatprep.mubr.f32.mxu0 0.0
    %899 = vmatmul.mubr.f32.gmra.mxu0 %v830
    %v900 = vpop.f32.mrf.mxu0
    %v901 = vadd.f32 0.0, %v900
    %v902 = vpop.f32.mrf.mxu0
    %903 = vdwg.mxu0
    %904 = vrot.lane.b32.xlu0 %v149, 112
    %v905 = vpop.permute.xlu0 %904
    %906 = vrot.lane.b32.xlu0 %v149, 80
    %v907 = vpop.permute.xlu0 %906
    %v908 = vsel %vm160, %v905, 0
    %v910 = vsel %vm160, %v907, 0
    %912 = vmatprep.subr.mxu0 0.0
    %913 = vmatpush1.xpose.msra.mxu0 0.0
    %914 = vmatprep.subr.mxu0 0.0
    %915 = vmatpush1.xpose.msra.mxu0 0.0
    %916 = vmatprep.subr.mxu0 0.0
    %917 = vmatpush1.xpose.msra.mxu0 0.0
    %918 = vmatprep.subr.mxu0 0.0
    %919 = vmatpush1.xpose.msra.mxu0 0.0
    %920 = vmatprep.subr.mxu0 0.0
    %921 = vmatpush1.xpose.msra.mxu0 0.0
    %922 = vmatprep.subr.mxu0 0.0
    %923 = vmatpush1.xpose.msra.mxu0 0.0
    %924 = vmatprep.subr.mxu0 0.0
    %925 = vmatpush1.xpose.msra.mxu0 0.0
    %926 = vmatprep.subr.mxu0 0.0
    %927 = vmatpush1.xpose.msra.mxu0 0.0
    %928 = vmatprep.subr.mxu0 0.0
    %929 = vmatpush1.xpose.msra.mxu0 0.0
    %930 = vmatprep.subr.mxu0 0.0
    %931 = vmatpush1.xpose.msra.mxu0 0.0
    %932 = vmatprep.subr.mxu0 0.0
    %933 = vmatpush1.xpose.msra.mxu0 0.0
    %934 = vmatprep.subr.mxu0 0.0
    %935 = vmatpush1.xpose.msra.mxu0 0.0
    %936 = vmatprep.subr.mxu0 0.0
    %937 = vmatpush1.xpose.msra.mxu0 0.0
    %938 = vmatprep.subr.mxu0 0.0
    %939 = vmatpush1.xpose.msra.mxu0 0.0
    %940 = vmatprep.subr.mxu0 0.0
    %941 = vmatpush1.xpose.msra.mxu0 0.0
    %942 = vmatprep.subr.mxu0 0.0
    %943 = vmatpush1.xpose.msra.mxu0 %v910
    %944 = vmatprep.subr.mxu0 0.0
    %945 = vmatpush2.xpose.msra.mxu0 0.0
    %946 = vmatprep.subr.mxu0 0.0
    %947 = vmatpush2.xpose.msra.mxu0 0.0
    %948 = vmatprep.subr.mxu0 0.0
    %949 = vmatpush2.xpose.msra.mxu0 0.0
    %950 = vmatprep.subr.mxu0 0.0
    %951 = vmatpush2.xpose.msra.mxu0 0.0
    %952 = vmatprep.subr.mxu0 0.0
    %953 = vmatpush2.xpose.msra.mxu0 0.0
    %954 = vmatprep.subr.mxu0 0.0
    %955 = vmatpush2.xpose.msra.mxu0 0.0
    %956 = vmatprep.subr.mxu0 0.0
    %957 = vmatpush2.xpose.msra.mxu0 0.0
    %958 = vmatprep.subr.mxu0 0.0
    %959 = vmatpush2.xpose.msra.mxu0 0.0
    %960 = vmatprep.subr.mxu0 0.0
    %961 = vmatpush2.xpose.msra.mxu0 0.0
    %962 = vmatprep.subr.mxu0 0.0
    %963 = vmatpush2.xpose.msra.mxu0 0.0
    %964 = vmatprep.subr.mxu0 0.0
    %965 = vmatpush2.xpose.msra.mxu0 0.0
    %966 = vmatprep.subr.mxu0 0.0
    %967 = vmatpush2.xpose.msra.mxu0 0.0
    %968 = vmatprep.subr.mxu0 0.0
    %969 = vmatpush2.xpose.msra.mxu0 0.0
    %970 = vmatprep.subr.mxu0 0.0
    %971 = vmatpush2.xpose.msra.mxu0 0.0
    %972 = vmatprep.subr.mxu0 0.0
    %973 = vmatpush2.xpose.msra.mxu0 0.0
    %974 = vmatprep.subr.mxu0 0.0
    %975 = vmatpush2.xpose.msra.mxu0 0.0
    %976 = vmatprep.mubr.f32.mxu0 0.0
    %977 = vmatmul.mubr.f32.gmra.mxu0 %v908
    %v978 = vpop.f32.mrf.mxu0
    %v979 = vadd.f32 0.0, %v978
    %v980 = vpop.f32.mrf.mxu0
    %981 = vdwg.mxu0
    %v982 = vmul.f32 %v901, 0.17677669
    %v983 = vmul.f32 %v979, 0.17677669
    %v984 = vsel %vm315, %v982, 1e-09
    %v985 = vsel %vm315, %v983, 1e-09
    %v986 = vsel %vm160, %v984, -inf
    %987 = vmax.xlane.f32.xlu0 %v986
    %v988 = vpop.xlane.xlu0 %987
    %v989 = vsel %vm160, %v985, -inf
    %990 = vmax.xlane.f32.xlu0 %v989
    %v991 = vpop.xlane.xlu0 %990
    %v992 = vsub.f32 %v984, %v988
    %v993 = vsub.f32 %v985, %v991
    %v994 = vmul.f32 %v992, 1.442695
    %v995 = vpow.pop %v994
    %v996 = vmul.f32 %v993, 1.442695
    %v997 = vpow.pop %v996
    %v998 = vsel %vm160, %v995, 0.0
    %999 = vadd.xlane.f32.xlu0 %v998
    %v1000 = vpop.xlane.xlu0 %999
    %v1001 = vsel %vm160, %v997, 0.0
    %1002 = vadd.xlane.f32.xlu0 %v1001
    %v1003 = vpop.xlane.xlu0 %1002
    %v1004 = vrcp.pop %v1000
    %v1005 = vrcp.pop %v1003
    %v1006 = vmul.f32 %v995, %v1004
    %v1007 = vmul.f32 %v997, %v1005
    %1008 = vrot.lane.b32.xlu0 %v144, 48
    %v1009 = vpop.permute.xlu0 %1008
    %v1012 = vsel %vm160, %v1006, 0
    %1014 = vmatprep.subr.mxu0 0.0
    %1015 = vmatpush1.msra.mxu0 0.0
    %1016 = vmatprep.subr.mxu0 0.0
    %1017 = vmatpush1.msra.mxu0 0.0
    %1018 = vmatprep.subr.mxu0 0.0
    %1019 = vmatpush1.msra.mxu0 0.0
    %1020 = vmatprep.subr.mxu0 0.0
    %1021 = vmatpush1.msra.mxu0 0.0
    %1022 = vmatprep.subr.mxu0 0.0
    %1023 = vmatpush1.msra.mxu0 0.0
    %1024 = vmatprep.subr.mxu0 0.0
    %1025 = vmatpush1.msra.mxu0 0.0
    %1026 = vmatprep.subr.mxu0 0.0
    %1027 = vmatpush1.msra.mxu0 0.0
    %1028 = vmatprep.subr.mxu0 0.0
    %1029 = vmatpush1.msra.mxu0 0.0
    %1030 = vmatprep.subr.mxu0 0.0
    %1031 = vmatpush1.msra.mxu0 0.0
    %1032 = vmatprep.subr.mxu0 0.0
    %1033 = vmatpush1.msra.mxu0 0.0
    %1034 = vmatprep.subr.mxu0 0.0
    %1035 = vmatpush1.msra.mxu0 0.0
    %1036 = vmatprep.subr.mxu0 0.0
    %1037 = vmatpush1.msra.mxu0 0.0
    %1038 = vmatprep.subr.mxu0 0.0
    %1039 = vmatpush1.msra.mxu0 0.0
    %1040 = vmatprep.subr.mxu0 0.0
    %1041 = vmatpush1.msra.mxu0 0.0
    %1042 = vmatprep.subr.mxu0 0.0
    %1043 = vmatpush1.msra.mxu0 0.0
    %1044 = vmatprep.subr.mxu0 0.0
    %1045 = vmatpush1.msra.mxu0 %v1009
    %1046 = vmatprep.subr.mxu0 0.0
    %1047 = vmatpush2.msra.mxu0 0.0
    %1048 = vmatprep.subr.mxu0 0.0
    %1049 = vmatpush2.msra.mxu0 0.0
    %1050 = vmatprep.subr.mxu0 0.0
    %1051 = vmatpush2.msra.mxu0 0.0
    %1052 = vmatprep.subr.mxu0 0.0
    %1053 = vmatpush2.msra.mxu0 0.0
    %1054 = vmatprep.subr.mxu0 0.0
    %1055 = vmatpush2.msra.mxu0 0.0
    %1056 = vmatprep.subr.mxu0 0.0
    %1057 = vmatpush2.msra.mxu0 0.0
    %1058 = vmatprep.subr.mxu0 0.0
    %1059 = vmatpush2.msra.mxu0 0.0
    %1060 = vmatprep.subr.mxu0 0.0
    %1061 = vmatpush2.msra.mxu0 0.0
    %1062 = vmatprep.subr.mxu0 0.0
    %1063 = vmatpush2.msra.mxu0 0.0
    %1064 = vmatprep.subr.mxu0 0.0
    %1065 = vmatpush2.msra.mxu0 0.0
    %1066 = vmatprep.subr.mxu0 0.0
    %1067 = vmatpush2.msra.mxu0 0.0
    %1068 = vmatprep.subr.mxu0 0.0
    %1069 = vmatpush2.msra.mxu0 0.0
    %1070 = vmatprep.subr.mxu0 0.0
    %1071 = vmatpush2.msra.mxu0 0.0
    %1072 = vmatprep.subr.mxu0 0.0
    %1073 = vmatpush2.msra.mxu0 0.0
    %1074 = vmatprep.subr.mxu0 0.0
    %1075 = vmatpush2.msra.mxu0 0.0
    %1076 = vmatprep.subr.mxu0 0.0
    %1077 = vmatpush2.msra.mxu0 0.0
    %1078 = vmatprep.mubr.f32.mxu0 0.0
    %1079 = vmatmul.mubr.f32.gmra.mxu0 %v1012
    %v1080 = vpop.f32.mrf.mxu0
    %v1081 = vadd.f32 0.0, %v1080
    %v1082 = vpop.f32.mrf.mxu0
    %1083 = vdwg.mxu0
    %1084 = vrot.lane.b32.xlu0 %v149, 48
    %v1085 = vpop.permute.xlu0 %1084
    %v1088 = vsel %vm160, %v1007, 0
    %1090 = vmatprep.subr.mxu0 0.0
    %1091 = vmatpush1.msra.mxu0 0.0
    %1092 = vmatprep.subr.mxu0 0.0
    %1093 = vmatpush1.msra.mxu0 0.0
    %1094 = vmatprep.subr.mxu0 0.0
    %1095 = vmatpush1.msra.mxu0 0.0
    %1096 = vmatprep.subr.mxu0 0.0
    %1097 = vmatpush1.msra.mxu0 0.0
    %1098 = vmatprep.subr.mxu0 0.0
    %1099 = vmatpush1.msra.mxu0 0.0
    %1100 = vmatprep.subr.mxu0 0.0
    %1101 = vmatpush1.msra.mxu0 0.0
    %1102 = vmatprep.subr.mxu0 0.0
    %1103 = vmatpush1.msra.mxu0 0.0
    %1104 = vmatprep.subr.mxu0 0.0
    %1105 = vmatpush1.msra.mxu0 0.0
    %1106 = vmatprep.subr.mxu0 0.0
    %1107 = vmatpush1.msra.mxu0 0.0
    %1108 = vmatprep.subr.mxu0 0.0
    %1109 = vmatpush1.msra.mxu0 0.0
    %1110 = vmatprep.subr.mxu0 0.0
    %1111 = vmatpush1.msra.mxu0 0.0
    %1112 = vmatprep.subr.mxu0 0.0
    %1113 = vmatpush1.msra.mxu0 0.0
    %1114 = vmatprep.subr.mxu0 0.0
    %1115 = vmatpush1.msra.mxu0 0.0
    %1116 = vmatprep.subr.mxu0 0.0
    %1117 = vmatpush1.msra.mxu0 0.0
    %1118 = vmatprep.subr.mxu0 0.0
    %1119 = vmatpush1.msra.mxu0 0.0
    %1120 = vmatprep.subr.mxu0 0.0
    %1121 = vmatpush1.msra.mxu0 %v1085
    %1122 = vmatprep.subr.mxu0 0.0
    %1123 = vmatpush2.msra.mxu0 0.0
    %1124 = vmatprep.subr.mxu0 0.0
    %1125 = vmatpush2.msra.mxu0 0.0
    %1126 = vmatprep.subr.mxu0 0.0
    %1127 = vmatpush2.msra.mxu0 0.0
    %1128 = vmatprep.subr.mxu0 0.0
    %1129 = vmatpush2.msra.mxu0 0.0
    %1130 = vmatprep.subr.mxu0 0.0
    %1131 = vmatpush2.msra.mxu0 0.0
    %1132 = vmatprep.subr.mxu0 0.0
    %1133 = vmatpush2.msra.mxu0 0.0
    %1134 = vmatprep.subr.mxu0 0.0
    %1135 = vmatpush2.msra.mxu0 0.0
    %1136 = vmatprep.subr.mxu0 0.0
    %1137 = vmatpush2.msra.mxu0 0.0
    %1138 = vmatprep.subr.mxu0 0.0
    %1139 = vmatpush2.msra.mxu0 0.0
    %1140 = vmatprep.subr.mxu0 0.0
    %1141 = vmatpush2.msra.mxu0 0.0
    %1142 = vmatprep.subr.mxu0 0.0
    %1143 = vmatpush2.msra.mxu0 0.0
    %1144 = vmatprep.subr.mxu0 0.0
    %1145 = vmatpush2.msra.mxu0 0.0
    %1146 = vmatprep.subr.mxu0 0.0
    %1147 = vmatpush2.msra.mxu0 0.0
    %1148 = vmatprep.subr.mxu0 0.0
    %1149 = vmatpush2.msra.mxu0 0.0
    %1150 = vmatprep.subr.mxu0 0.0
    %1151 = vmatpush2.msra.mxu0 0.0
    %1152 = vmatprep.subr.mxu0 0.0
    %1153 = vmatpush2.msra.mxu0 0.0
    %1154 = vmatprep.mubr.f32.mxu0 0.0
    %1155 = vmatmul.mubr.f32.gmra.mxu0 %v1088
    %v1156 = vpop.f32.mrf.mxu0
    %v1157 = vadd.f32 0.0, %v1156
    %v1158 = vpop.f32.mrf.mxu0
    %1159 = vdwg.mxu0
    %1160 = vrot.lane.b32.xlu0 %v144, 104
    %v1161 = vpop.permute.xlu0 %1160
    %1162 = vrot.lane.b32.xlu0 %v144, 72
    %v1163 = vpop.permute.xlu0 %1162
    %v1164 = vsel %vm160, %v1161, 0
    %v1166 = vsel %vm160, %v1163, 0
    %1168 = vmatprep.subr.mxu0 0.0
    %1169 = vmatpush1.xpose.msra.mxu0 0.0
    %1170 = vmatprep.subr.mxu0 0.0
    %1171 = vmatpush1.xpose.msra.mxu0 0.0
    %1172 = vmatprep.subr.mxu0 0.0
    %1173 = vmatpush1.xpose.msra.mxu0 0.0
    %1174 = vmatprep.subr.mxu0 0.0
    %1175 = vmatpush1.xpose.msra.mxu0 0.0
    %1176 = vmatprep.subr.mxu0 0.0
    %1177 = vmatpush1.xpose.msra.mxu0 0.0
    %1178 = vmatprep.subr.mxu0 0.0
    %1179 = vmatpush1.xpose.msra.mxu0 0.0
    %1180 = vmatprep.subr.mxu0 0.0
    %1181 = vmatpush1.xpose.msra.mxu0 0.0
    %1182 = vmatprep.subr.mxu0 0.0
    %1183 = vmatpush1.xpose.msra.mxu0 0.0
    %1184 = vmatprep.subr.mxu0 0.0
    %1185 = vmatpush1.xpose.msra.mxu0 0.0
    %1186 = vmatprep.subr.mxu0 0.0
    %1187 = vmatpush1.xpose.msra.mxu0 0.0
    %1188 = vmatprep.subr.mxu0 0.0
    %1189 = vmatpush1.xpose.msra.mxu0 0.0
    %1190 = vmatprep.subr.mxu0 0.0
    %1191 = vmatpush1.xpose.msra.mxu0 0.0
    %1192 = vmatprep.subr.mxu0 0.0
    %1193 = vmatpush1.xpose.msra.mxu0 0.0
    %1194 = vmatprep.subr.mxu0 0.0
    %1195 = vmatpush1.xpose.msra.mxu0 0.0
    %1196 = vmatprep.subr.mxu0 0.0
    %1197 = vmatpush1.xpose.msra.mxu0 0.0
    %1198 = vmatprep.subr.mxu0 0.0
    %1199 = vmatpush1.xpose.msra.mxu0 %v1166
    %1200 = vmatprep.subr.mxu0 0.0
    %1201 = vmatpush2.xpose.msra.mxu0 0.0
    %1202 = vmatprep.subr.mxu0 0.0
    %1203 = vmatpush2.xpose.msra.mxu0 0.0
    %1204 = vmatprep.subr.mxu0 0.0
    %1205 = vmatpush2.xpose.msra.mxu0 0.0
    %1206 = vmatprep.subr.mxu0 0.0
    %1207 = vmatpush2.xpose.msra.mxu0 0.0
    %1208 = vmatprep.subr.mxu0 0.0
    %1209 = vmatpush2.xpose.msra.mxu0 0.0
    %1210 = vmatprep.subr.mxu0 0.0
    %1211 = vmatpush2.xpose.msra.mxu0 0.0
    %1212 = vmatprep.subr.mxu0 0.0
    %1213 = vmatpush2.xpose.msra.mxu0 0.0
    %1214 = vmatprep.subr.mxu0 0.0
    %1215 = vmatpush2.xpose.msra.mxu0 0.0
    %1216 = vmatprep.subr.mxu0 0.0
    %1217 = vmatpush2.xpose.msra.mxu0 0.0
    %1218 = vmatprep.subr.mxu0 0.0
    %1219 = vmatpush2.xpose.msra.mxu0 0.0
    %1220 = vmatprep.subr.mxu0 0.0
    %1221 = vmatpush2.xpose.msra.mxu0 0.0
    %1222 = vmatprep.subr.mxu0 0.0
    %1223 = vmatpush2.xpose.msra.mxu0 0.0
    %1224 = vmatprep.subr.mxu0 0.0
    %1225 = vmatpush2.xpose.msra.mxu0 0.0
    %1226 = vmatprep.subr.mxu0 0.0
    %1227 = vmatpush2.xpose.msra.mxu0 0.0
    %1228 = vmatprep.subr.mxu0 0.0
    %1229 = vmatpush2.xpose.msra.mxu0 0.0
    %1230 = vmatprep.subr.mxu0 0.0
    %1231 = vmatpush2.xpose.msra.mxu0 0.0
    %1232 = vmatprep.mubr.f32.mxu0 0.0
    %1233 = vmatmul.mubr.f32.gmra.mxu0 %v1164
    %v1234 = vpop.f32.mrf.mxu0
    %v1235 = vadd.f32 0.0, %v1234
    %v1236 = vpop.f32.mrf.mxu0
    %1237 = vdwg.mxu0
    %1238 = vrot.lane.b32.xlu0 %v149, 104
    %v1239 = vpop.permute.xlu0 %1238
    %1240 = vrot.lane.b32.xlu0 %v149, 72
    %v1241 = vpop.permute.xlu0 %1240
    %v1242 = vsel %vm160, %v1239, 0
    %v1244 = vsel %vm160, %v1241, 0
    %1246 = vmatprep.subr.mxu0 0.0
    %1247 = vmatpush1.xpose.msra.mxu0 0.0
    %1248 = vmatprep.subr.mxu0 0.0
    %1249 = vmatpush1.xpose.msra.mxu0 0.0
    %1250 = vmatprep.subr.mxu0 0.0
    %1251 = vmatpush1.xpose.msra.mxu0 0.0
    %1252 = vmatprep.subr.mxu0 0.0
    %1253 = vmatpush1.xpose.msra.mxu0 0.0
    %1254 = vmatprep.subr.mxu0 0.0
    %1255 = vmatpush1.xpose.msra.mxu0 0.0
    %1256 = vmatprep.subr.mxu0 0.0
    %1257 = vmatpush1.xpose.msra.mxu0 0.0
    %1258 = vmatprep.subr.mxu0 0.0
    %1259 = vmatpush1.xpose.msra.mxu0 0.0
    %1260 = vmatprep.subr.mxu0 0.0
    %1261 = vmatpush1.xpose.msra.mxu0 0.0
    %1262 = vmatprep.subr.mxu0 0.0
    %1263 = vmatpush1.xpose.msra.mxu0 0.0
    %1264 = vmatprep.subr.mxu0 0.0
    %1265 = vmatpush1.xpose.msra.mxu0 0.0
    %1266 = vmatprep.subr.mxu0 0.0
    %1267 = vmatpush1.xpose.msra.mxu0 0.0
    %1268 = vmatprep.subr.mxu0 0.0
    %1269 = vmatpush1.xpose.msra.mxu0 0.0
    %1270 = vmatprep.subr.mxu0 0.0
    %1271 = vmatpush1.xpose.msra.mxu0 0.0
    %1272 = vmatprep.subr.mxu0 0.0
    %1273 = vmatpush1.xpose.msra.mxu0 0.0
    %1274 = vmatprep.subr.mxu0 0.0
    %1275 = vmatpush1.xpose.msra.mxu0 0.0
    %1276 = vmatprep.subr.mxu0 0.0
    %1277 = vmatpush1.xpose.msra.mxu0 %v1244
    %1278 = vmatprep.subr.mxu0 0.0
    %1279 = vmatpush2.xpose.msra.mxu0 0.0
    %1280 = vmatprep.subr.mxu0 0.0
    %1281 = vmatpush2.xpose.msra.mxu0 0.0
    %1282 = vmatprep.subr.mxu0 0.0
    %1283 = vmatpush2.xpose.msra.mxu0 0.0
    %1284 = vmatprep.subr.mxu0 0.0
    %1285 = vmatpush2.xpose.msra.mxu0 0.0
    %1286 = vmatprep.subr.mxu0 0.0
    %1287 = vmatpush2.xpose.msra.mxu0 0.0
    %1288 = vmatprep.subr.mxu0 0.0
    %1289 = vmatpush2.xpose.msra.mxu0 0.0
    %1290 = vmatprep.subr.mxu0 0.0
    %1291 = vmatpush2.xpose.msra.mxu0 0.0
    %1292 = vmatprep.subr.mxu0 0.0
    %1293 = vmatpush2.xpose.msra.mxu0 0.0
    %1294 = vmatprep.subr.mxu0 0.0
    %1295 = vmatpush2.xpose.msra.mxu0 0.0
    %1296 = vmatprep.subr.mxu0 0.0
    %1297 = vmatpush2.xpose.msra.mxu0 0.0
    %1298 = vmatprep.subr.mxu0 0.0
    %1299 = vmatpush2.xpose.msra.mxu0 0.0
    %1300 = vmatprep.subr.mxu0 0.0
    %1301 = vmatpush2.xpose.msra.mxu0 0.0
    %1302 = vmatprep.subr.mxu0 0.0
    %1303 = vmatpush2.xpose.msra.mxu0 0.0
    %1304 = vmatprep.subr.mxu0 0.0
    %1305 = vmatpush2.xpose.msra.mxu0 0.0
    %1306 = vmatprep.subr.mxu0 0.0
    %1307 = vmatpush2.xpose.msra.mxu0 0.0
    %1308 = vmatprep.subr.mxu0 0.0
    %1309 = vmatpush2.xpose.msra.mxu0 0.0
    %1310 = vmatprep.mubr.f32.mxu0 0.0
    %1311 = vmatmul.mubr.f32.gmra.mxu0 %v1242
    %v1312 = vpop.f32.mrf.mxu0
    %v1313 = vadd.f32 0.0, %v1312
    %v1314 = vpop.f32.mrf.mxu0
    %1315 = vdwg.mxu0
    %v1316 = vmul.f32 %v1235, 0.17677669
    %v1317 = vmul.f32 %v1313, 0.17677669
    %v1318 = vsel %vm315, %v1316, 1e-09
    %v1319 = vsel %vm315, %v1317, 1e-09
    %v1320 = vsel %vm160, %v1318, -inf
    %1321 = vmax.xlane.f32.xlu0 %v1320
    %v1322 = vpop.xlane.xlu0 %1321
    %v1323 = vsel %vm160, %v1319, -inf
    %1324 = vmax.xlane.f32.xlu0 %v1323
    %v1325 = vpop.xlane.xlu0 %1324
    %v1326 = vsub.f32 %v1318, %v1322
    %v1327 = vsub.f32 %v1319, %v1325
    %v1328 = vmul.f32 %v1326, 1.442695
    %v1329 = vpow.pop %v1328
    %v1330 = vmul.f32 %v1327, 1.442695
    %v1331 = vpow.pop %v1330
    %v1332 = vsel %vm160, %v1329, 0.0
    %1333 = vadd.xlane.f32.xlu0 %v1332
    %v1334 = vpop.xlane.xlu0 %1333
    %v1335 = vsel %vm160, %v1331, 0.0
    %1336 = vadd.xlane.f32.xlu0 %v1335
    %v1337 = vpop.xlane.xlu0 %1336
    %v1338 = vrcp.pop %v1334
    %v1339 = vrcp.pop %v1337
    %v1340 = vmul.f32 %v1329, %v1338
    %v1341 = vmul.f32 %v1331, %v1339
    %1342 = vrot.lane.b32.xlu0 %v144, 40
    %v1343 = vpop.permute.xlu0 %1342
    %v1346 = vsel %vm160, %v1340, 0
    %1348 = vmatprep.subr.mxu0 0.0
    %1349 = vmatpush1.msra.mxu0 0.0
    %1350 = vmatprep.subr.mxu0 0.0
    %1351 = vmatpush1.msra.mxu0 0.0
    %1352 = vmatprep.subr.mxu0 0.0
    %1353 = vmatpush1.msra.mxu0 0.0
    %1354 = vmatprep.subr.mxu0 0.0
    %1355 = vmatpush1.msra.mxu0 0.0
    %1356 = vmatprep.subr.mxu0 0.0
    %1357 = vmatpush1.msra.mxu0 0.0
    %1358 = vmatprep.subr.mxu0 0.0
    %1359 = vmatpush1.msra.mxu0 0.0
    %1360 = vmatprep.subr.mxu0 0.0
    %1361 = vmatpush1.msra.mxu0 0.0
    %1362 = vmatprep.subr.mxu0 0.0
    %1363 = vmatpush1.msra.mxu0 0.0
    %1364 = vmatprep.subr.mxu0 0.0
    %1365 = vmatpush1.msra.mxu0 0.0
    %1366 = vmatprep.subr.mxu0 0.0
    %1367 = vmatpush1.msra.mxu0 0.0
    %1368 = vmatprep.subr.mxu0 0.0
    %1369 = vmatpush1.msra.mxu0 0.0
    %1370 = vmatprep.subr.mxu0 0.0
    %1371 = vmatpush1.msra.mxu0 0.0
    %1372 = vmatprep.subr.mxu0 0.0
    %1373 = vmatpush1.msra.mxu0 0.0
    %1374 = vmatprep.subr.mxu0 0.0
    %1375 = vmatpush1.msra.mxu0 0.0
    %1376 = vmatprep.subr.mxu0 0.0
    %1377 = vmatpush1.msra.mxu0 0.0
    %1378 = vmatprep.subr.mxu0 0.0
    %1379 = vmatpush1.msra.mxu0 %v1343
    %1380 = vmatprep.subr.mxu0 0.0
    %1381 = vmatpush2.msra.mxu0 0.0
    %1382 = vmatprep.subr.mxu0 0.0
    %1383 = vmatpush2.msra.mxu0 0.0
    %1384 = vmatprep.subr.mxu0 0.0
    %1385 = vmatpush2.msra.mxu0 0.0
    %1386 = vmatprep.subr.mxu0 0.0
    %1387 = vmatpush2.msra.mxu0 0.0
    %1388 = vmatprep.subr.mxu0 0.0
    %1389 = vmatpush2.msra.mxu0 0.0
    %1390 = vmatprep.subr.mxu0 0.0
    %1391 = vmatpush2.msra.mxu0 0.0
    %1392 = vmatprep.subr.mxu0 0.0
    %1393 = vmatpush2.msra.mxu0 0.0
    %1394 = vmatprep.subr.mxu0 0.0
    %1395 = vmatpush2.msra.mxu0 0.0
    %1396 = vmatprep.subr.mxu0 0.0
    %1397 = vmatpush2.msra.mxu0 0.0
    %1398 = vmatprep.subr.mxu0 0.0
    %1399 = vmatpush2.msra.mxu0 0.0
    %1400 = vmatprep.subr.mxu0 0.0
    %1401 = vmatpush2.msra.mxu0 0.0
    %1402 = vmatprep.subr.mxu0 0.0
    %1403 = vmatpush2.msra.mxu0 0.0
    %1404 = vmatprep.subr.mxu0 0.0
    %1405 = vmatpush2.msra.mxu0 0.0
    %1406 = vmatprep.subr.mxu0 0.0
    %1407 = vmatpush2.msra.mxu0 0.0
    %1408 = vmatprep.subr.mxu0 0.0
    %1409 = vmatpush2.msra.mxu0 0.0
    %1410 = vmatprep.subr.mxu0 0.0
    %1411 = vmatpush2.msra.mxu0 0.0
    %1412 = vmatprep.mubr.f32.mxu0 0.0
    %1413 = vmatmul.mubr.f32.gmra.mxu0 %v1346
    %v1414 = vpop.f32.mrf.mxu0
    %v1415 = vadd.f32 0.0, %v1414
    %v1416 = vpop.f32.mrf.mxu0
    %1417 = vdwg.mxu0
    %1418 = vrot.lane.b32.xlu0 %v149, 40
    %v1419 = vpop.permute.xlu0 %1418
    %v1422 = vsel %vm160, %v1341, 0
    %1424 = vmatprep.subr.mxu0 0.0
    %1425 = vmatpush1.msra.mxu0 0.0
    %1426 = vmatprep.subr.mxu0 0.0
    %1427 = vmatpush1.msra.mxu0 0.0
    %1428 = vmatprep.subr.mxu0 0.0
    %1429 = vmatpush1.msra.mxu0 0.0
    %1430 = vmatprep.subr.mxu0 0.0
    %1431 = vmatpush1.msra.mxu0 0.0
    %1432 = vmatprep.subr.mxu0 0.0
    %1433 = vmatpush1.msra.mxu0 0.0
    %1434 = vmatprep.subr.mxu0 0.0
    %1435 = vmatpush1.msra.mxu0 0.0
    %1436 = vmatprep.subr.mxu0 0.0
    %1437 = vmatpush1.msra.mxu0 0.0
    %1438 = vmatprep.subr.mxu0 0.0
    %1439 = vmatpush1.msra.mxu0 0.0
    %1440 = vmatprep.subr.mxu0 0.0
    %1441 = vmatpush1.msra.mxu0 0.0
    %1442 = vmatprep.subr.mxu0 0.0
    %1443 = vmatpush1.msra.mxu0 0.0
    %1444 = vmatprep.subr.mxu0 0.0
    %1445 = vmatpush1.msra.mxu0 0.0
    %1446 = vmatprep.subr.mxu0 0.0
    %1447 = vmatpush1.msra.mxu0 0.0
    %1448 = vmatprep.subr.mxu0 0.0
    %1449 = vmatpush1.msra.mxu0 0.0
    %1450 = vmatprep.subr.mxu0 0.0
    %1451 = vmatpush1.msra.mxu0 0.0
    %1452 = vmatprep.subr.mxu0 0.0
    %1453 = vmatpush1.msra.mxu0 0.0
    %1454 = vmatprep.subr.mxu0 0.0
    %1455 = vmatpush1.msra.mxu0 %v1419
    %1456 = vmatprep.subr.mxu0 0.0
    %1457 = vmatpush2.msra.mxu0 0.0
    %1458 = vmatprep.subr.mxu0 0.0
    %1459 = vmatpush2.msra.mxu0 0.0
    %1460 = vmatprep.subr.mxu0 0.0
    %1461 = vmatpush2.msra.mxu0 0.0
    %1462 = vmatprep.subr.mxu0 0.0
    %1463 = vmatpush2.msra.mxu0 0.0
    %1464 = vmatprep.subr.mxu0 0.0
    %1465 = vmatpush2.msra.mxu0 0.0
    %1466 = vmatprep.subr.mxu0 0.0
    %1467 = vmatpush2.msra.mxu0 0.0
    %1468 = vmatprep.subr.mxu0 0.0
    %1469 = vmatpush2.msra.mxu0 0.0
    %1470 = vmatprep.subr.mxu0 0.0
    %1471 = vmatpush2.msra.mxu0 0.0
    %1472 = vmatprep.subr.mxu0 0.0
    %1473 = vmatpush2.msra.mxu0 0.0
    %1474 = vmatprep.subr.mxu0 0.0
    %1475 = vmatpush2.msra.mxu0 0.0
    %1476 = vmatprep.subr.mxu0 0.0
    %1477 = vmatpush2.msra.mxu0 0.0
    %1478 = vmatprep.subr.mxu0 0.0
    %1479 = vmatpush2.msra.mxu0 0.0
    %1480 = vmatprep.subr.mxu0 0.0
    %1481 = vmatpush2.msra.mxu0 0.0
    %1482 = vmatprep.subr.mxu0 0.0
    %1483 = vmatpush2.msra.mxu0 0.0
    %1484 = vmatprep.subr.mxu0 0.0
    %1485 = vmatpush2.msra.mxu0 0.0
    %1486 = vmatprep.subr.mxu0 0.0
    %1487 = vmatpush2.msra.mxu0 0.0
    %1488 = vmatprep.mubr.f32.mxu0 0.0
    %1489 = vmatmul.mubr.f32.gmra.mxu0 %v1422
    %v1490 = vpop.f32.mrf.mxu0
    %v1491 = vadd.f32 0.0, %v1490
    %v1492 = vpop.f32.mrf.mxu0
    %1493 = vdwg.mxu0
    %1496 = vrot.lane.b32.xlu0 %v747, 8
    %v1497 = vpop.permute.xlu0 %1496
    %1498 = vrot.lane.b32.xlu0 %v823, 8
    %v1499 = vpop.permute.xlu0 %1498
    %1504 = vrot.lane.b32.xlu0 %v1081, 16
    %v1505 = vpop.permute.xlu0 %1504
    %1506 = vrot.lane.b32.xlu0 %v1157, 16
    %v1507 = vpop.permute.xlu0 %1506
    %1512 = vrot.lane.b32.xlu0 %v1415, 24
    %v1513 = vpop.permute.xlu0 %1512
    %1514 = vrot.lane.b32.xlu0 %v1491, 24
    %v1515 = vpop.permute.xlu0 %1514
    %v1518 = vsel %vm160, %v413, %v1497
    %v1519 = vsel %vm160, %v489, %v1499
    %vm1520 = vcmask 130048
    %v1521 = vsel %vm1520, %v1518, %v1505
    %v1522 = vsel %vm1520, %v1519, %v1507
    %vm1523 = vcmask 195584
    %v1524 = vsel %vm1523, %v1521, %v1513
    %v1525 = vsel %vm1523, %v1522, %v1515
    %v1526 = vld [vmem:[%s2] sm:$0xff]
    %v1527 = vld [vmem:[%s2 + $0x8] sm:$0xff]
    %v1528 = vld [vmem:[%s2 + $0x10] sm:$0xff]
    %v1529 = vld [vmem:[%s2 + $0x18] sm:$0xff]
    %v1531 = vsel %vm27, %v1524, 0
    %v1534 = vsel %vm27, %v1525, 0
    %1536 = vmatprep.subr.mxu0 0.0
    %1537 = vmatpush1.msra.mxu0 0.0
    %1538 = vmatprep.subr.mxu0 0.0
    %1539 = vmatpush1.msra.mxu0 0.0
    %1540 = vmatprep.subr.mxu0 0.0
    %1541 = vmatpush1.msra.mxu0 0.0
    %1542 = vmatprep.subr.mxu0 0.0
    %1543 = vmatpush1.msra.mxu0 0.0
    %1544 = vmatprep.subr.mxu0 0.0
    %1545 = vmatpush1.msra.mxu0 0.0
    %1546 = vmatprep.subr.mxu0 0.0
    %1547 = vmatpush1.msra.mxu0 0.0
    %1548 = vmatprep.subr.mxu0 0.0
    %1549 = vmatpush1.msra.mxu0 0.0
    %1550 = vmatprep.subr.mxu0 0.0
    %1551 = vmatpush1.msra.mxu0 0.0
    %1552 = vmatprep.subr.mxu0 0.0
    %1553 = vmatpush1.msra.mxu0 0.0
    %1554 = vmatprep.subr.mxu0 0.0
    %1555 = vmatpush1.msra.mxu0 0.0
    %1556 = vmatprep.subr.mxu0 0.0
    %1557 = vmatpush1.msra.mxu0 0.0
    %1558 = vmatprep.subr.mxu0 0.0
    %1559 = vmatpush1.msra.mxu0 0.0
    %1560 = vmatprep.subr.mxu0 0.0
    %1561 = vmatpush1.msra.mxu0 %v1529
    %1562 = vmatprep.subr.mxu0 0.0
    %1563 = vmatpush1.msra.mxu0 %v1528
    %1564 = vmatprep.subr.mxu0 0.0
    %1565 = vmatpush1.msra.mxu0 %v1527
    %1566 = vmatprep.subr.mxu0 0.0
    %1567 = vmatpush1.msra.mxu0 %v1526
    %1568 = vmatprep.subr.mxu0 0.0
    %1569 = vmatpush2.msra.mxu0 0.0
    %1570 = vmatprep.subr.mxu0 0.0
    %1571 = vmatpush2.msra.mxu0 0.0
    %1572 = vmatprep.subr.mxu0 0.0
    %1573 = vmatpush2.msra.mxu0 0.0
    %1574 = vmatprep.subr.mxu0 0.0
    %1575 = vmatpush2.msra.mxu0 0.0
    %1576 = vmatprep.subr.mxu0 0.0
    %1577 = vmatpush2.msra.mxu0 0.0
    %1578 = vmatprep.subr.mxu0 0.0
    %1579 = vmatpush2.msra.mxu0 0.0
    %1580 = vmatprep.subr.mxu0 0.0
    %1581 = vmatpush2.msra.mxu0 0.0
    %1582 = vmatprep.subr.mxu0 0.0
    %1583 = vmatpush2.msra.mxu0 0.0
    %1584 = vmatprep.subr.mxu0 0.0
    %1585 = vmatpush2.msra.mxu0 0.0
    %1586 = vmatprep.subr.mxu0 0.0
    %1587 = vmatpush2.msra.mxu0 0.0
    %1588 = vmatprep.subr.mxu0 0.0
    %1589 = vmatpush2.msra.mxu0 0.0
    %1590 = vmatprep.subr.mxu0 0.0
    %1591 = vmatpush2.msra.mxu0 0.0
    %1592 = vmatprep.subr.mxu0 0.0
    %1593 = vmatpush2.msra.mxu0 0.0
    %1594 = vmatprep.subr.mxu0 0.0
    %1595 = vmatpush2.msra.mxu0 0.0
    %1596 = vmatprep.subr.mxu0 0.0
    %1597 = vmatpush2.msra.mxu0 0.0
    %1598 = vmatprep.subr.mxu0 0.0
    %1599 = vmatpush2.msra.mxu0 0.0
    %1600 = vmatprep.mubr.f32.mxu0 0.0
    %1601 = vmatmul.mubr.f32.gmra.mxu0 %v1531
    %v1602 = vpop.f32.mrf.mxu0
    %v1603 = vadd.f32 0.0, %v1602
    %v1604 = vpop.f32.mrf.mxu0
    %1605 = vmatprep.mubr.f32.mxu0 0.0
    %1606 = vmatmul.mubr.f32.gmra.mxu0 %v1534
    %v1607 = vpop.f32.mrf.mxu0
    %v1608 = vadd.f32 0.0, %v1607
    %v1609 = vpop.f32.mrf.mxu0
    %1610 = vdwg.mxu0
    %v1611 = vadd.f32 %v24, %v1603
    %v1612 = vadd.f32 %v25, %v1608
    %v1613 = vsel %vm27, %v1611, 0.0
    %1614 = vadd.xlane.f32.xlu0 %v1613
    %v1615 = vpop.xlane.xlu0 %1614
    %v1616 = vsel %vm27, %v1612, 0.0
    %1617 = vadd.xlane.f32.xlu0 %v1616
    %v1618 = vpop.xlane.xlu0 %1617
    %v1619 = vmul.f32 %v1615, %v34
    %v1620 = vmul.f32 %v1618, %v34
    %v1621 = vsub.f32 %v1611, %v1619
    %v1622 = vsub.f32 %v1612, %v1620
    %v1623 = vmul.f32 %v1621, %v1621
    %v1624 = vmul.f32 %v1622, %v1622
    %v1625 = vsel %vm27, %v1623, 0.0
    %1626 = vadd.xlane.f32.xlu0 %v1625
    %v1627 = vpop.xlane.xlu0 %1626
    %v1628 = vsel %vm27, %v1624, 0.0
    %1629 = vadd.xlane.f32.xlu0 %v1628
    %v1630 = vpop.xlane.xlu0 %1629
    %v1631 = vmul.f32 %v1627, %v34
    %v1632 = vmul.f32 %v1630, %v34
    %v1633 = vadd.f32 %v1631, 1e-05
    %v1634 = vadd.f32 %v1632, 1e-05
    %v1635 = vrsqrt.pop %v1633
    %v1636 = vrsqrt.pop %v1634
    %v1637 = vmul.f32 %v1621, %v1635
    %v1638 = vmul.f32 %v1622, %v1636
    %v1639 = vlaneseq
    %v1640 = vshrl.u32 %v1639, 7
    %v1641 = vsub.s32 2, %v1640
    %v1642 = vrot.slane %v26, %v1641
    %v1643 = vmul.f32 %v1637, %v1642
    %v1644 = vmul.f32 %v1638, %v1642
    %v1645 = vlaneseq
    %v1646 = vshrl.u32 %v1645, 7
    %v1647 = vsub.s32 3, %v1646
    %v1648 = vrot.slane %v26, %v1647
    %v1649 = vadd.f32 %v1643, %v1648
    %v1650 = vadd.f32 %v1644, %v1648
    %v1651 = vld [vmem:[%s3] sm:$0xff]
    %v1652 = vld [vmem:[%s3 + $0x8] sm:$0xff]
    %v1653 = vld [vmem:[%s3 + $0x10] sm:$0xff]
    %v1654 = vld [vmem:[%s3 + $0x18] sm:$0xff]
    %v1656 = vsel %vm27, %v1649, 0
    %v1659 = vsel %vm27, %v1650, 0
    %1661 = vmatprep.subr.mxu0 0.0
    %1662 = vmatpush1.msra.mxu0 0.0
    %1663 = vmatprep.subr.mxu0 0.0
    %1664 = vmatpush1.msra.mxu0 0.0
    %1665 = vmatprep.subr.mxu0 0.0
    %1666 = vmatpush1.msra.mxu0 0.0
    %1667 = vmatprep.subr.mxu0 0.0
    %1668 = vmatpush1.msra.mxu0 0.0
    %1669 = vmatprep.subr.mxu0 0.0
    %1670 = vmatpush1.msra.mxu0 0.0
    %1671 = vmatprep.subr.mxu0 0.0
    %1672 = vmatpush1.msra.mxu0 0.0
    %1673 = vmatprep.subr.mxu0 0.0
    %1674 = vmatpush1.msra.mxu0 0.0
    %1675 = vmatprep.subr.mxu0 0.0
    %1676 = vmatpush1.msra.mxu0 0.0
    %1677 = vmatprep.subr.mxu0 0.0
    %1678 = vmatpush1.msra.mxu0 0.0
    %1679 = vmatprep.subr.mxu0 0.0
    %1680 = vmatpush1.msra.mxu0 0.0
    %1681 = vmatprep.subr.mxu0 0.0
    %1682 = vmatpush1.msra.mxu0 0.0
    %1683 = vmatprep.subr.mxu0 0.0
    %1684 = vmatpush1.msra.mxu0 0.0
    %1685 = vmatprep.subr.mxu0 0.0
    %1686 = vmatpush1.msra.mxu0 %v1654
    %1687 = vmatprep.subr.mxu0 0.0
    %1688 = vmatpush1.msra.mxu0 %v1653
    %1689 = vmatprep.subr.mxu0 0.0
    %1690 = vmatpush1.msra.mxu0 %v1652
    %1691 = vmatprep.subr.mxu0 0.0
    %1692 = vmatpush1.msra.mxu0 %v1651
    %1693 = vmatprep.subr.mxu0 0.0
    %1694 = vmatpush2.msra.mxu0 0.0
    %1695 = vmatprep.subr.mxu0 0.0
    %1696 = vmatpush2.msra.mxu0 0.0
    %1697 = vmatprep.subr.mxu0 0.0
    %1698 = vmatpush2.msra.mxu0 0.0
    %1699 = vmatprep.subr.mxu0 0.0
    %1700 = vmatpush2.msra.mxu0 0.0
    %1701 = vmatprep.subr.mxu0 0.0
    %1702 = vmatpush2.msra.mxu0 0.0
    %1703 = vmatprep.subr.mxu0 0.0
    %1704 = vmatpush2.msra.mxu0 0.0
    %1705 = vmatprep.subr.mxu0 0.0
    %1706 = vmatpush2.msra.mxu0 0.0
    %1707 = vmatprep.subr.mxu0 0.0
    %1708 = vmatpush2.msra.mxu0 0.0
    %1709 = vmatprep.subr.mxu0 0.0
    %1710 = vmatpush2.msra.mxu0 0.0
    %1711 = vmatprep.subr.mxu0 0.0
    %1712 = vmatpush2.msra.mxu0 0.0
    %1713 = vmatprep.subr.mxu0 0.0
    %1714 = vmatpush2.msra.mxu0 0.0
    %1715 = vmatprep.subr.mxu0 0.0
    %1716 = vmatpush2.msra.mxu0 0.0
    %1717 = vmatprep.subr.mxu0 0.0
    %1718 = vmatpush2.msra.mxu0 0.0
    %1719 = vmatprep.subr.mxu0 0.0
    %1720 = vmatpush2.msra.mxu0 0.0
    %1721 = vmatprep.subr.mxu0 0.0
    %1722 = vmatpush2.msra.mxu0 0.0
    %1723 = vmatprep.subr.mxu0 0.0
    %1724 = vmatpush2.msra.mxu0 0.0
    %1725 = vmatprep.mubr.f32.mxu0 0.0
    %1726 = vmatmul.mubr.f32.gmra.mxu0 %v1656
    %v1727 = vpop.f32.mrf.mxu0
    %v1728 = vadd.f32 0.0, %v1727
    %v1729 = vpop.f32.mrf.mxu0
    %1730 = vmatprep.mubr.f32.mxu0 0.0
    %1731 = vmatmul.mubr.f32.gmra.mxu0 %v1659
    %v1732 = vpop.f32.mrf.mxu0
    %v1733 = vadd.f32 0.0, %v1732
    %v1734 = vpop.f32.mrf.mxu0
    %1735 = vdwg.mxu0
    %v1736 = vmax.f32 %v1728, 0.0
    %v1737 = vmax.f32 %v1733, 0.0
    %v1738 = vld [vmem:[%s4] sm:$0xff]
    %v1739 = vld [vmem:[%s4 + $0x8] sm:$0xff]
    %v1740 = vld [vmem:[%s4 + $0x10] sm:$0xff]
    %v1741 = vld [vmem:[%s4 + $0x18] sm:$0xff]
    %v1742 = vld [vmem:[%s4 + $0x20] sm:$0xff]
    %v1743 = vld [vmem:[%s4 + $0x28] sm:$0xff]
    %v1744 = vld [vmem:[%s4 + $0x30] sm:$0xff]
    %v1745 = vld [vmem:[%s4 + $0x38] sm:$0xff]
    %v1746 = vld [vmem:[%s4 + $0x40] sm:$0xff]
    %v1747 = vld [vmem:[%s4 + $0x48] sm:$0xff]
    %v1748 = vld [vmem:[%s4 + $0x50] sm:$0xff]
    %v1749 = vld [vmem:[%s4 + $0x58] sm:$0xff]
    %v1750 = vld [vmem:[%s4 + $0x60] sm:$0xff]
    %v1751 = vld [vmem:[%s4 + $0x68] sm:$0xff]
    %v1752 = vld [vmem:[%s4 + $0x70] sm:$0xff]
    %v1753 = vld [vmem:[%s4 + $0x78] sm:$0xff]
    %1754 = vmatprep.subr.mxu0 0.0
    %1755 = vmatpush1.msra.mxu0 %v1753
    %1756 = vmatprep.subr.mxu0 0.0
    %1757 = vmatpush1.msra.mxu0 %v1752
    %1758 = vmatprep.subr.mxu0 0.0
    %1759 = vmatpush1.msra.mxu0 %v1751
    %1760 = vmatprep.subr.mxu0 0.0
    %1761 = vmatpush1.msra.mxu0 %v1750
    %1762 = vmatprep.subr.mxu0 0.0
    %1763 = vmatpush1.msra.mxu0 %v1749
    %1764 = vmatprep.subr.mxu0 0.0
    %1765 = vmatpush1.msra.mxu0 %v1748
    %1766 = vmatprep.subr.mxu0 0.0
    %1767 = vmatpush1.msra.mxu0 %v1747
    %1768 = vmatprep.subr.mxu0 0.0
    %1769 = vmatpush1.msra.mxu0 %v1746
    %1770 = vmatprep.subr.mxu0 0.0
    %1771 = vmatpush1.msra.mxu0 %v1745
    %1772 = vmatprep.subr.mxu0 0.0
    %1773 = vmatpush1.msra.mxu0 %v1744
    %1774 = vmatprep.subr.mxu0 0.0
    %1775 = vmatpush1.msra.mxu0 %v1743
    %1776 = vmatprep.subr.mxu0 0.0
    %1777 = vmatpush1.msra.mxu0 %v1742
    %1778 = vmatprep.subr.mxu0 0.0
    %1779 = vmatpush1.msra.mxu0 %v1741
    %1780 = vmatprep.subr.mxu0 0.0
    %1781 = vmatpush1.msra.mxu0 %v1740
    %1782 = vmatprep.subr.mxu0 0.0
    %1783 = vmatpush1.msra.mxu0 %v1739
    %1784 = vmatprep.subr.mxu0 0.0
    %1785 = vmatpush1.msra.mxu0 %v1738
    %1786 = vmatprep.subr.mxu0 0.0
    %1787 = vmatpush2.msra.mxu0 0.0
    %1788 = vmatprep.subr.mxu0 0.0
    %1789 = vmatpush2.msra.mxu0 0.0
    %1790 = vmatprep.subr.mxu0 0.0
    %1791 = vmatpush2.msra.mxu0 0.0
    %1792 = vmatprep.subr.mxu0 0.0
    %1793 = vmatpush2.msra.mxu0 0.0
    %1794 = vmatprep.subr.mxu0 0.0
    %1795 = vmatpush2.msra.mxu0 0.0
    %1796 = vmatprep.subr.mxu0 0.0
    %1797 = vmatpush2.msra.mxu0 0.0
    %1798 = vmatprep.subr.mxu0 0.0
    %1799 = vmatpush2.msra.mxu0 0.0
    %1800 = vmatprep.subr.mxu0 0.0
    %1801 = vmatpush2.msra.mxu0 0.0
    %1802 = vmatprep.subr.mxu0 0.0
    %1803 = vmatpush2.msra.mxu0 0.0
    %1804 = vmatprep.subr.mxu0 0.0
    %1805 = vmatpush2.msra.mxu0 0.0
    %1806 = vmatprep.subr.mxu0 0.0
    %1807 = vmatpush2.msra.mxu0 0.0
    %1808 = vmatprep.subr.mxu0 0.0
    %1809 = vmatpush2.msra.mxu0 0.0
    %1810 = vmatprep.subr.mxu0 0.0
    %1811 = vmatpush2.msra.mxu0 0.0
    %1812 = vmatprep.subr.mxu0 0.0
    %1813 = vmatpush2.msra.mxu0 0.0
    %1814 = vmatprep.subr.mxu0 0.0
    %1815 = vmatpush2.msra.mxu0 0.0
    %1816 = vmatprep.subr.mxu0 0.0
    %1817 = vmatpush2.msra.mxu0 0.0
    %1818 = vmatprep.mubr.f32.mxu0 0.0
    %1819 = vmatmul.mubr.f32.gmra.mxu0 %v1736
    %v1820 = vpop.f32.mrf.mxu0
    %v1821 = vadd.f32 0.0, %v1820
    %v1822 = vpop.f32.mrf.mxu0
    %1823 = vmatprep.mubr.f32.mxu0 0.0
    %1824 = vmatmul.mubr.f32.gmra.mxu0 %v1737
    %v1825 = vpop.f32.mrf.mxu0
    %v1826 = vadd.f32 0.0, %v1825
    %v1827 = vpop.f32.mrf.mxu0
    %1828 = vdwg.mxu0
    %v1829 = vadd.f32 %v1611, %v1821
    %v1830 = vadd.f32 %v1612, %v1826
    %1831 = vst.msk [vmem:[#allocation2] sm:$0xff] %vm27, %v1829
    %1832 = vst.msk [vmem:[#allocation2 + $0x8] sm:$0xff] %vm27, %v1830
    // Predicated region
    $region26: #{tpu_custom_call.1} parent=1 // pred_check
      _
    $region27: #{tpu_custom_call.1} parent=1 // pred_check_branch
      %1834 = sbr.rel (0) target = $region29
    $region28: #{tpu_custom_call.1} parent=1 // pred_region
      %s1836 = ssub.s32 256, 256
      %1837 = vsyncadd [#allocation3], %s1836
      %s1838 = sshll.u32 [#allocation2], 4
      %s1839 = int_to_ptr.vmem [resolvable:$true] %s1838
      %1844 = dma.vmem_to_hbm [thread:$0]  %s1839, 256, %s6, [#allocation3], 128, 128, 8
    $region29: #{tpu_custom_call.1} parent=1 // pred_fallthru
      _
    // Predicated region
    $region30: #{tpu_custom_call.1} parent=1 // pred_check
      _
    $region31: #{tpu_custom_call.1} parent=1 // pred_check_branch
      %1846 = sbr.rel (0) target = $region33
    $region32: #{tpu_custom_call.1} parent=1 // pred_region
      %1847 = dma.done [#allocation3], 256
    $region33: #{tpu_custom_call.1} parent=1 // pred_fallthru
      _
    %1848 = vsyncpa [#allocation3], 1

</llo_original>
